<compile_context>
chip_gen: v6e
topology: v6e:2x2x1
jax: 0.10.0
libtpu: 0.0.40
codegen_flags: <defaults>
</compile_context>

<pallas_src>
import jax
import jax.numpy as jnp
from jax.experimental import pallas as pl
from jax.experimental.pallas import tpu as pltpu
from functools import partial


def mha_kernel(q_ref, k_ref, v_ref,
               wq_ref, bq_ref, wk_ref, bk_ref, wv_ref, bv_ref,
               wp_ref, bp_ref,
               o_ref,
               *, batch, seq_len, num_heads, head_dim):
    """Single-shot MHA: fused bf16 projections, one batched QK^T, one softmax,
    one batched attn@V, one output projection. Everything stays in VMEM/vregs."""
    B, S, H, Dh = batch, seq_len, num_heads, head_dim
    M = B * S
    cdt = jnp.bfloat16  # MXU operand dtype; accumulation + elementwise stay f32.

    # ---- Fused lane-dense projections: one (M,E)@(E,E) matmul per Q/K/V. ----
    # Weights are pre-packed host-side (heads along columns, bf16); the
    # 1/sqrt(Dh) scale is already folded into wq/bq.
    q_all = jnp.dot(q_ref[...].astype(cdt), wq_ref[...],
                    preferred_element_type=jnp.float32) + bq_ref[...]
    k_all = jnp.dot(k_ref[...].astype(cdt), wk_ref[...],
                    preferred_element_type=jnp.float32) + bk_ref[...]
    v_all = jnp.dot(v_ref[...].astype(cdt), wv_ref[...],
                    preferred_element_type=jnp.float32) + bv_ref[...]

    # ---- Head-batched layout: (M, E) -> (H*B, S, Dh), done once per tensor. ----
    # Column block h (static lane slice) + free major-dim reshape + major concat.
    # Batch index in the fused dim is n = h*B + b (consistent for q/k/v and out).
    def to_heads(x_all):
        blocks = [x_all[:, h * Dh:(h + 1) * Dh].reshape(B, S, Dh)
                  for h in range(H)]
        return jnp.concatenate(blocks, axis=0)              # (H*B, S, Dh)

    q_h = to_heads(q_all).astype(cdt)
    k_h = to_heads(k_all).astype(cdt)
    v_h = to_heads(v_all).astype(cdt)

    # ---- One batched QK^T over all (batch, head) pairs (contract last dims). ----
    scores = jnp.einsum('nqd,nkd->nqk', q_h, k_h,
                        preferred_element_type=jnp.float32)  # (H*B, S, S) f32

    # TODO(synk): attn_mask would be applied to `scores` here; not wired in.

    # ---- Numerically-stable softmax in f32 over one tile; reciprocal on EUP. ----
    m = jnp.max(scores, axis=-1, keepdims=True)
    p = jnp.exp(scores - m)
    denom = jnp.sum(p, axis=-1, keepdims=True)
    attn = p * pl.reciprocal(denom, approx=True)

    # ---- One batched attn @ V. ----
    o_h = jnp.einsum('nqk,nkd->nqd', attn.astype(cdt), v_h,
                     preferred_element_type=jnp.float32)     # (H*B, S, Dh) f32

    # ---- Reassemble natural (M, E) head-concat layout; single output matmul. ----
    o_cat = jnp.concatenate(
        [o_h[h * B:(h + 1) * B].reshape(M, Dh) for h in range(H)],
        axis=-1)                                             # (M, E)
    out = jnp.dot(o_cat.astype(cdt), wp_ref[...],
                  preferred_element_type=jnp.float32) + bp_ref[...]

    o_ref[...] = out.astype(o_ref.dtype)


def pack_params(params, *, num_heads):
    """One-time host-side weight packing (call once, reuse across forwards).

    * Q/K/V: per-head (H,E,Dh) weights packed to (E, H*Dh) == (E, E), bf16,
      with 1/sqrt(Dh) folded into Wq and bq.
    * Output projection Wp stays (E, E), cast to bf16; biases stay f32.
    """
    H = num_heads
    E = params["wp"].shape[0]
    Dh = E // H
    scale = Dh ** (-0.5)

    def pack_w(w, s=1.0):   # (H, E, Dh) -> (E, H*Dh), bf16
        return (jnp.transpose(w, (1, 0, 2)).reshape(E, H * Dh) * s).astype(jnp.bfloat16)

    def pack_b(b, s=1.0):   # (H, Dh) -> (1, H*Dh), f32
        return (b.reshape(1, H * Dh) * s).astype(jnp.float32)

    return {
        "wq": pack_w(params["wq"], scale), "bq": pack_b(params["bq"], scale),
        "wk": pack_w(params["wk"]),        "bk": pack_b(params["bk"]),
        "wv": pack_w(params["wv"]),        "bv": pack_b(params["bv"]),
        "wp": params["wp"].astype(jnp.bfloat16),      # (E, E)
        "bp": params["bp"].astype(jnp.float32),       # (1, E)
    }


def multi_head_attention(query, key, value, packed, *, num_heads):
    """query/key/value: (B, S, E) float32. `packed`: output of pack_params."""
    B, S, E = query.shape
    Dh = E // num_heads
    M = B * S

    kernel = partial(mha_kernel, batch=B, seq_len=S,
                     num_heads=num_heads, head_dim=Dh)

    vmem = lambda: pl.BlockSpec(memory_space=pltpu.MemorySpace.VMEM)

    out = pl.pallas_call(
        kernel,
        out_shape=jax.ShapeDtypeStruct((M, E), query.dtype),
        in_specs=[vmem() for _ in range(11)],
        out_specs=vmem(),
    )(query.reshape(M, E), key.reshape(M, E), value.reshape(M, E),
      packed["wq"], packed["bq"], packed["wk"], packed["bk"],
      packed["wv"], packed["bv"], packed["wp"], packed["bp"])

    return out.reshape(B, S, E)


def init_params(key, embed_dim, num_heads):
    """Deterministic synthetic parameter init (uniform, PyTorch-Linear-like bounds)."""
    head_dim = embed_dim // num_heads
    keys = jax.random.split(key, 8)
    lim = 1.0 / (embed_dim ** 0.5)
    return {
        "wq": jax.random.uniform(keys[0], (num_heads, embed_dim, head_dim),
                                 jnp.float32, -lim, lim),
        "bq": jax.random.uniform(keys[1], (num_heads, head_dim),
                                 jnp.float32, -lim, lim),
        "wk": jax.random.uniform(keys[2], (num_heads, embed_dim, head_dim),
                                 jnp.float32, -lim, lim),
        "bk": jax.random.uniform(keys[3], (num_heads, head_dim),
                                 jnp.float32, -lim, lim),
        "wv": jax.random.uniform(keys[4], (num_heads, embed_dim, head_dim),
                                 jnp.float32, -lim, lim),
        "bv": jax.random.uniform(keys[5], (num_heads, head_dim),
                                 jnp.float32, -lim, lim),
        "wp": jax.random.uniform(keys[6], (embed_dim, embed_dim),
                                 jnp.float32, -lim, lim),
        "bp": jax.random.uniform(keys[7], (1, embed_dim),
                                 jnp.float32, -lim, lim),
    }


def reference_mha(query, key, value, params, *, num_heads):
    """Pure-JAX f32 reference reproducing the PyTorch forward (mask=None, eval)."""
    E = query.shape[-1]
    head_dim = E // num_heads
    scale = head_dim ** (-0.5)
    outs = []
    for h in range(num_heads):
        q = query @ params["wq"][h] + params["bq"][h]
        k = key @ params["wk"][h] + params["bk"][h]
        v = value @ params["wv"][h] + params["bv"][h]
        scores = jnp.einsum("bqd,bkd->bqk", q, k) * scale
        w = jax.nn.softmax(scores, axis=-1)
        outs.append(jnp.einsum("bqk,bkd->bqd", w, v))
    x = jnp.concatenate(outs, axis=-1)
    return x @ params["wp"] + params["bp"][0]


if __name__ == "__main__":
    B, S, E, H = 2, 8, 64, 4
    key = jax.random.PRNGKey(0)
    kq, kk, kv, kp = jax.random.split(key, 4)

    query = jax.random.normal(kq, (B, S, E), jnp.float32)
    key_t = jax.random.normal(kk, (B, S, E), jnp.float32)
    value = jax.random.normal(kv, (B, S, E), jnp.float32)
    params = init_params(kp, E, H)

    packed = pack_params(params, num_heads=H)          # one-time packing
    out = multi_head_attention(query, key_t, value, packed, num_heads=H)
    out = jax.block_until_ready(out)

    ref = reference_mha(query, key_t, value, params, num_heads=H)
    assert out.shape == (B, S, E)
    # Tolerance reflects bf16 MXU operands (f32 accumulate) and the EUP
    # approximate reciprocal in the softmax; structural bugs produce O(0.3+)
    # errors, so this still catches them.
    err = float(jnp.max(jnp.abs(out - ref)))
    assert jnp.allclose(out, ref, atol=5e-2, rtol=5e-2), err

    print("KERNEL_OK")
</pallas_src>

<mosaic_0001>
module attributes {stable_mosaic.version = 11 : i64} {
  func.func @mha_kernel(%arg0: memref<16x64xf32, #tpu.memory_space<vmem>>, %arg1: memref<16x64xf32, #tpu.memory_space<vmem>>, %arg2: memref<16x64xf32, #tpu.memory_space<vmem>>, %arg3: memref<64x64xbf16, #tpu.memory_space<vmem>>, %arg4: memref<1x64xf32, #tpu.memory_space<vmem>>, %arg5: memref<64x64xbf16, #tpu.memory_space<vmem>>, %arg6: memref<1x64xf32, #tpu.memory_space<vmem>>, %arg7: memref<64x64xbf16, #tpu.memory_space<vmem>>, %arg8: memref<1x64xf32, #tpu.memory_space<vmem>>, %arg9: memref<64x64xbf16, #tpu.memory_space<vmem>>, %arg10: memref<1x64xf32, #tpu.memory_space<vmem>>, %arg11: memref<16x64xf32, #tpu.memory_space<vmem>>) attributes {dimension_semantics = [], scalar_prefetch = 0 : i64, scratch_operands = 0 : i64, tpu.core_type = #tpu.core_type<tc>} {
    %c0 = arith.constant 0 : index
    %c0_0 = arith.constant 0 : index
    %0 = vector.load %arg0[%c0, %c0_0] : memref<16x64xf32, #tpu.memory_space<vmem>>, vector<16x64xf32>
    %1 = arith.truncf %0 : vector<16x64xf32> to vector<16x64xbf16>
    %c0_1 = arith.constant 0 : index
    %c0_2 = arith.constant 0 : index
    %2 = vector.load %arg3[%c0_1, %c0_2] : memref<64x64xbf16, #tpu.memory_space<vmem>>, vector<64x64xbf16>
    %cst = arith.constant dense<0.000000e+00> : vector<16x64xf32>
    %3 = tpu.matmul %1, %2, %cst {dimension_numbers = #tpu.dot_dimension_numbers<[1], [0], [0], [1], [0, 0, 1, 1], [], []>} : vector<16x64xbf16>, vector<64x64xbf16>, vector<16x64xf32> -> vector<16x64xf32>
    %c0_3 = arith.constant 0 : index
    %c0_4 = arith.constant 0 : index
    %4 = vector.load %arg4[%c0_3, %c0_4] : memref<1x64xf32, #tpu.memory_space<vmem>>, vector<1x64xf32>
    %5 = vector.broadcast %4 : vector<1x64xf32> to vector<16x64xf32>
    %6 = arith.addf %3, %5 : vector<16x64xf32>
    %c0_5 = arith.constant 0 : index
    %c0_6 = arith.constant 0 : index
    %7 = vector.load %arg1[%c0_5, %c0_6] : memref<16x64xf32, #tpu.memory_space<vmem>>, vector<16x64xf32>
    %8 = arith.truncf %7 : vector<16x64xf32> to vector<16x64xbf16>
    %c0_7 = arith.constant 0 : index
    %c0_8 = arith.constant 0 : index
    %9 = vector.load %arg5[%c0_7, %c0_8] : memref<64x64xbf16, #tpu.memory_space<vmem>>, vector<64x64xbf16>
    %cst_9 = arith.constant dense<0.000000e+00> : vector<16x64xf32>
    %10 = tpu.matmul %8, %9, %cst_9 {dimension_numbers = #tpu.dot_dimension_numbers<[1], [0], [0], [1], [0, 0, 1, 1], [], []>} : vector<16x64xbf16>, vector<64x64xbf16>, vector<16x64xf32> -> vector<16x64xf32>
    %c0_10 = arith.constant 0 : index
    %c0_11 = arith.constant 0 : index
    %11 = vector.load %arg6[%c0_10, %c0_11] : memref<1x64xf32, #tpu.memory_space<vmem>>, vector<1x64xf32>
    %12 = vector.broadcast %11 : vector<1x64xf32> to vector<16x64xf32>
    %13 = arith.addf %10, %12 : vector<16x64xf32>
    %c0_12 = arith.constant 0 : index
    %c0_13 = arith.constant 0 : index
    %14 = vector.load %arg2[%c0_12, %c0_13] : memref<16x64xf32, #tpu.memory_space<vmem>>, vector<16x64xf32>
    %15 = arith.truncf %14 : vector<16x64xf32> to vector<16x64xbf16>
    %c0_14 = arith.constant 0 : index
    %c0_15 = arith.constant 0 : index
    %16 = vector.load %arg7[%c0_14, %c0_15] : memref<64x64xbf16, #tpu.memory_space<vmem>>, vector<64x64xbf16>
    %cst_16 = arith.constant dense<0.000000e+00> : vector<16x64xf32>
    %17 = tpu.matmul %15, %16, %cst_16 {dimension_numbers = #tpu.dot_dimension_numbers<[1], [0], [0], [1], [0, 0, 1, 1], [], []>} : vector<16x64xbf16>, vector<64x64xbf16>, vector<16x64xf32> -> vector<16x64xf32>
    %c0_17 = arith.constant 0 : index
    %c0_18 = arith.constant 0 : index
    %18 = vector.load %arg8[%c0_17, %c0_18] : memref<1x64xf32, #tpu.memory_space<vmem>>, vector<1x64xf32>
    %19 = vector.broadcast %18 : vector<1x64xf32> to vector<16x64xf32>
    %20 = arith.addf %17, %19 : vector<16x64xf32>
    %21 = vector.extract_strided_slice %6 {offsets = [0, 0], sizes = [16, 16], strides = [1, 1]} : vector<16x64xf32> to vector<16x16xf32>
    %22 = vector.shape_cast %21 : vector<16x16xf32> to vector<2x8x16xf32>
    %23 = vector.extract_strided_slice %6 {offsets = [0, 16], sizes = [16, 16], strides = [1, 1]} : vector<16x64xf32> to vector<16x16xf32>
    %24 = vector.shape_cast %23 : vector<16x16xf32> to vector<2x8x16xf32>
    %25 = vector.extract_strided_slice %6 {offsets = [0, 32], sizes = [16, 16], strides = [1, 1]} : vector<16x64xf32> to vector<16x16xf32>
    %26 = vector.shape_cast %25 : vector<16x16xf32> to vector<2x8x16xf32>
    %27 = vector.extract_strided_slice %6 {offsets = [0, 48], sizes = [16, 16], strides = [1, 1]} : vector<16x64xf32> to vector<16x16xf32>
    %28 = vector.shape_cast %27 : vector<16x16xf32> to vector<2x8x16xf32>
    %29 = tpu.concatenate %22, %24, %26, %28 in 0 : vector<2x8x16xf32>, vector<2x8x16xf32>, vector<2x8x16xf32>, vector<2x8x16xf32> -> vector<8x8x16xf32>
    %30 = arith.truncf %29 : vector<8x8x16xf32> to vector<8x8x16xbf16>
    %31 = vector.extract_strided_slice %13 {offsets = [0, 0], sizes = [16, 16], strides = [1, 1]} : vector<16x64xf32> to vector<16x16xf32>
    %32 = vector.shape_cast %31 : vector<16x16xf32> to vector<2x8x16xf32>
    %33 = vector.extract_strided_slice %13 {offsets = [0, 16], sizes = [16, 16], strides = [1, 1]} : vector<16x64xf32> to vector<16x16xf32>
    %34 = vector.shape_cast %33 : vector<16x16xf32> to vector<2x8x16xf32>
    %35 = vector.extract_strided_slice %13 {offsets = [0, 32], sizes = [16, 16], strides = [1, 1]} : vector<16x64xf32> to vector<16x16xf32>
    %36 = vector.shape_cast %35 : vector<16x16xf32> to vector<2x8x16xf32>
    %37 = vector.extract_strided_slice %13 {offsets = [0, 48], sizes = [16, 16], strides = [1, 1]} : vector<16x64xf32> to vector<16x16xf32>
    %38 = vector.shape_cast %37 : vector<16x16xf32> to vector<2x8x16xf32>
    %39 = tpu.concatenate %32, %34, %36, %38 in 0 : vector<2x8x16xf32>, vector<2x8x16xf32>, vector<2x8x16xf32>, vector<2x8x16xf32> -> vector<8x8x16xf32>
    %40 = arith.truncf %39 : vector<8x8x16xf32> to vector<8x8x16xbf16>
    %41 = vector.extract_strided_slice %20 {offsets = [0, 0], sizes = [16, 16], strides = [1, 1]} : vector<16x64xf32> to vector<16x16xf32>
    %42 = vector.shape_cast %41 : vector<16x16xf32> to vector<2x8x16xf32>
    %43 = vector.extract_strided_slice %20 {offsets = [0, 16], sizes = [16, 16], strides = [1, 1]} : vector<16x64xf32> to vector<16x16xf32>
    %44 = vector.shape_cast %43 : vector<16x16xf32> to vector<2x8x16xf32>
    %45 = vector.extract_strided_slice %20 {offsets = [0, 32], sizes = [16, 16], strides = [1, 1]} : vector<16x64xf32> to vector<16x16xf32>
    %46 = vector.shape_cast %45 : vector<16x16xf32> to vector<2x8x16xf32>
    %47 = vector.extract_strided_slice %20 {offsets = [0, 48], sizes = [16, 16], strides = [1, 1]} : vector<16x64xf32> to vector<16x16xf32>
    %48 = vector.shape_cast %47 : vector<16x16xf32> to vector<2x8x16xf32>
    %49 = tpu.concatenate %42, %44, %46, %48 in 0 : vector<2x8x16xf32>, vector<2x8x16xf32>, vector<2x8x16xf32>, vector<2x8x16xf32> -> vector<8x8x16xf32>
    %50 = arith.truncf %49 : vector<8x8x16xf32> to vector<8x8x16xbf16>
    "tpu.trace_start"() <{level = 10 : i32, message = "nqd,nkd->nqk"}> : () -> ()
    %cst_19 = arith.constant dense<0.000000e+00> : vector<8x8x8xf32>
    %51 = tpu.matmul %30, %40, %cst_19 {dimension_numbers = #tpu.dot_dimension_numbers<[2], [2], [1], [1], [0, 0, 0, 1, 1, 1], [0], [0]>} : vector<8x8x16xbf16>, vector<8x8x16xbf16>, vector<8x8x8xf32> -> vector<8x8x8xf32>
    "tpu.trace_stop"() : () -> ()
    %cst_20 = arith.constant dense<0xFF800000> : vector<8x8xf32>
    %52 = vector.multi_reduction <maximumf>, %51, %cst_20 [2] : vector<8x8x8xf32> to vector<8x8xf32>
    %53 = vector.shape_cast %52 : vector<8x8xf32> to vector<8x8x1xf32>
    %54 = vector.broadcast %53 : vector<8x8x1xf32> to vector<8x8x8xf32>
    %55 = arith.subf %51, %54 : vector<8x8x8xf32>
    %56 = math.exp %55 : vector<8x8x8xf32>
    %cst_21 = arith.constant dense<0.000000e+00> : vector<8x8xf32>
    %57 = vector.multi_reduction <add>, %56, %cst_21 [2] : vector<8x8x8xf32> to vector<8x8xf32>
    %58 = vector.shape_cast %57 : vector<8x8xf32> to vector<8x8x1xf32>
    %59 = tpu.reciprocal %58 {approx = true} : vector<8x8x1xf32> -> vector<8x8x1xf32>
    %60 = vector.broadcast %59 : vector<8x8x1xf32> to vector<8x8x8xf32>
    %61 = arith.mulf %56, %60 : vector<8x8x8xf32>
    %62 = arith.truncf %61 : vector<8x8x8xf32> to vector<8x8x8xbf16>
    "tpu.trace_start"() <{level = 10 : i32, message = "nqk,nkd->nqd"}> : () -> ()
    %cst_22 = arith.constant dense<0.000000e+00> : vector<8x8x16xf32>
    %63 = tpu.matmul %62, %50, %cst_22 {dimension_numbers = #tpu.dot_dimension_numbers<[2], [1], [1], [2], [0, 0, 0, 1, 1, 2], [0], [0]>} : vector<8x8x8xbf16>, vector<8x8x16xbf16>, vector<8x8x16xf32> -> vector<8x8x16xf32>
    "tpu.trace_stop"() : () -> ()
    %64 = vector.extract_strided_slice %63 {offsets = [0, 0, 0], sizes = [2, 8, 16], strides = [1, 1, 1]} : vector<8x8x16xf32> to vector<2x8x16xf32>
    %65 = vector.shape_cast %64 : vector<2x8x16xf32> to vector<16x16xf32>
    %66 = vector.extract_strided_slice %63 {offsets = [2, 0, 0], sizes = [2, 8, 16], strides = [1, 1, 1]} : vector<8x8x16xf32> to vector<2x8x16xf32>
    %67 = vector.shape_cast %66 : vector<2x8x16xf32> to vector<16x16xf32>
    %68 = vector.extract_strided_slice %63 {offsets = [4, 0, 0], sizes = [2, 8, 16], strides = [1, 1, 1]} : vector<8x8x16xf32> to vector<2x8x16xf32>
    %69 = vector.shape_cast %68 : vector<2x8x16xf32> to vector<16x16xf32>
    %70 = vector.extract_strided_slice %63 {offsets = [6, 0, 0], sizes = [2, 8, 16], strides = [1, 1, 1]} : vector<8x8x16xf32> to vector<2x8x16xf32>
    %71 = vector.shape_cast %70 : vector<2x8x16xf32> to vector<16x16xf32>
    %72 = tpu.concatenate %65, %67, %69, %71 in 1 : vector<16x16xf32>, vector<16x16xf32>, vector<16x16xf32>, vector<16x16xf32> -> vector<16x64xf32>
    %73 = arith.truncf %72 : vector<16x64xf32> to vector<16x64xbf16>
    %c0_23 = arith.constant 0 : index
    %c0_24 = arith.constant 0 : index
    %74 = vector.load %arg9[%c0_23, %c0_24] : memref<64x64xbf16, #tpu.memory_space<vmem>>, vector<64x64xbf16>
    %cst_25 = arith.constant dense<0.000000e+00> : vector<16x64xf32>
    %75 = tpu.matmul %73, %74, %cst_25 {dimension_numbers = #tpu.dot_dimension_numbers<[1], [0], [0], [1], [0, 0, 1, 1], [], []>} : vector<16x64xbf16>, vector<64x64xbf16>, vector<16x64xf32> -> vector<16x64xf32>
    %c0_26 = arith.constant 0 : index
    %c0_27 = arith.constant 0 : index
    %76 = vector.load %arg10[%c0_26, %c0_27] : memref<1x64xf32, #tpu.memory_space<vmem>>, vector<1x64xf32>
    %77 = vector.broadcast %76 : vector<1x64xf32> to vector<16x64xf32>
    %78 = arith.addf %75, %77 : vector<16x64xf32>
    %c0_28 = arith.constant 0 : index
    %c0_29 = arith.constant 0 : index
    %79 = vector.load %arg11[%c0_28, %c0_29] : memref<16x64xf32, #tpu.memory_space<vmem>>, vector<16x64xf32>
    tpu.vector_store %arg11[%c0_28, %c0_29], %78 {strides = array<i32>} : memref<16x64xf32, #tpu.memory_space<vmem>>, vector<16x64xf32>,
    return
  }
}

</mosaic_0001>

<llo_original>
// kernel: tpu_custom_call.1
$region0: #{tpu_custom_call.1}
  #allocation0 [shape = 'u32[]', space=smem, size = 0x4, offset = 0x4, fixed_abs, tag = 'smem constant byte address 0x4 - core index']
  #allocation1 [shape = 'u32[144,128]{1,0:T(1,128)}', space=vmem, size = 0x12000, scoped, tag = 'internal scratch']
  %s0 = inlined_call_operand.hbm [shape: f32[16,64], index: 0, kind: input, shape index: {}]
  %s1 = inlined_call_operand.hbm [shape: f32[16,64], index: 1, kind: input, shape index: {}]
  %s2 = inlined_call_operand.hbm [shape: f32[16,64], index: 2, kind: input, shape index: {}]
  %s3 = inlined_call_operand.hbm [shape: bf16[64,64], index: 3, kind: input, shape index: {}]
  %s4 = inlined_call_operand.vmem [shape: f32[1,64], index: 4, kind: input, shape index: {}]
  %s5 = inlined_call_operand.hbm [shape: bf16[64,64], index: 5, kind: input, shape index: {}]
  %s6 = inlined_call_operand.vmem [shape: f32[1,64], index: 6, kind: input, shape index: {}]
  %s7 = inlined_call_operand.hbm [shape: bf16[64,64], index: 7, kind: input, shape index: {}]
  %s8 = inlined_call_operand.vmem [shape: f32[1,64], index: 8, kind: input, shape index: {}]
  %s9 = inlined_call_operand.hbm [shape: bf16[64,64], index: 9, kind: input, shape index: {}]
  %s10 = inlined_call_operand.vmem [shape: f32[1,64], index: 10, kind: input, shape index: {}]
  %s11 = inlined_call_operand.hbm [shape: f32[16,64], index: 11, kind: output, shape index: {}]
  %s12 = sld [smem:[#allocation0]]
  $region82: #{tpu_custom_call.1} parent=0
    _
  %s14 = ssub.s32 1, %s12
  %s15 = scalar_select 0, %s14, %s12
  $region1: #{tpu_custom_call.1} parent=0
    #allocation2 [shape = 'u8[8192]{0}', space=vmem, size = 0x2000, scoped, tag = 'input window, operand 0, single buffered']
    #allocation3 [shape = 's32[1]{0}', space=sflag, size = 0x4, scoped, tag = 'scoped memory for tpu_custom_call.1']
    #allocation4 [shape = 's32[1]{0}', space=sflag, size = 0x4, scoped, tag = 'scoped memory for tpu_custom_call.1']
    #allocation5 [shape = 'u8[8192]{0}', space=vmem, size = 0x2000, scoped, tag = 'input window, operand 1, single buffered']
    #allocation6 [shape = 's32[1]{0}', space=sflag, size = 0x4, scoped, tag = 'scoped memory for tpu_custom_call.1']
    #allocation7 [shape = 'u8[8192]{0}', space=vmem, size = 0x2000, scoped, tag = 'input window, operand 2, single buffered']
    #allocation8 [shape = 'u8[16384]{0}', space=vmem, size = 0x4000, scoped, tag = 'input window, operand 3, single buffered']
    #allocation9 [shape = 's32[1]{0}', space=sflag, size = 0x4, scoped, tag = 'scoped memory for tpu_custom_call.1']
    #allocation10 [shape = 'u8[16384]{0}', space=vmem, size = 0x4000, scoped, tag = 'input window, operand 5, single buffered']
    #allocation11 [shape = 'u8[16384]{0}', space=vmem, size = 0x4000, scoped, tag = 'input window, operand 7, single buffered']
    #allocation12 [shape = 's32[1]{0}', space=sflag, size = 0x4, scoped, tag = 'scoped memory for tpu_custom_call.1']
    #allocation13 [shape = 'u8[16384]{0}', space=vmem, size = 0x4000, scoped, tag = 'input window, operand 9, single buffered']
    #allocation14 [shape = 'u8[8192]{0}', space=vmem, size = 0x2000, scoped, tag = 'output window, operand 0, single buffered']
    %16 = vsyncpa [#allocation3], 0
    %17 = vsyncpa [#allocation6], 0
    %18 = vsyncpa [#allocation9], 0
    %19 = vsyncpa [#allocation12], 0
    %20 = vsyncpa [#allocation4], 0
    // Predicated region
    $region2: #{tpu_custom_call.1} parent=1 // pred_check
      _
    $region3: #{tpu_custom_call.1} parent=1 // pred_check_branch
      %22 = sbr.rel (0) target = $region5
    $region4: #{tpu_custom_call.1} parent=1 // pred_region
      %s24 = ssub.s32 256, 256
      %25 = vsyncadd [#allocation3], %s24
      %s26 = sshll.u32 [#allocation2], 4
      %s27 = int_to_ptr.vmem [resolvable:$true] %s26
      %32 = dma.hbm_to_vmem [thread:$0]  %s0, 256, %s27, [#allocation3], 128, 128, 8
    $region5: #{tpu_custom_call.1} parent=1 // pred_fallthru
      _
    // Predicated region
    $region6: #{tpu_custom_call.1} parent=1 // pred_check
      _
    $region7: #{tpu_custom_call.1} parent=1 // pred_check_branch
      %34 = sbr.rel (0) target = $region9
    $region8: #{tpu_custom_call.1} parent=1 // pred_region
      %s36 = ssub.s32 256, 256
      %37 = vsyncadd [#allocation6], %s36
      %s38 = sshll.u32 [#allocation5], 4
      %s39 = int_to_ptr.vmem [resolvable:$true] %s38
      %44 = dma.hbm_to_vmem [thread:$0]  %s1, 256, %s39, [#allocation6], 128, 128, 8
    $region9: #{tpu_custom_call.1} parent=1 // pred_fallthru
      _
    // Predicated region
    $region10: #{tpu_custom_call.1} parent=1 // pred_check
      _
    $region11: #{tpu_custom_call.1} parent=1 // pred_check_branch
      %46 = sbr.rel (0) target = $region13
    $region12: #{tpu_custom_call.1} parent=1 // pred_region
      %s48 = ssub.s32 256, 256
      %49 = vsyncadd [#allocation6], %s48
      %s50 = sshll.u32 [#allocation7], 4
      %s51 = int_to_ptr.vmem [resolvable:$true] %s50
      %56 = dma.hbm_to_vmem [thread:$0]  %s2, 256, %s51, [#allocation6], 128, 128, 8
    $region13: #{tpu_custom_call.1} parent=1 // pred_fallthru
      _
    // Predicated region
    $region14: #{tpu_custom_call.1} parent=1 // pred_check
      _
    $region15: #{tpu_custom_call.1} parent=1 // pred_check_branch
      %58 = sbr.rel (0) target = $region17
    $region16: #{tpu_custom_call.1} parent=1 // pred_region
      %s60 = ssub.s32 512, 512
      %61 = vsyncadd [#allocation9], %s60
      %s62 = sshll.u32 [#allocation8], 4
      %s63 = int_to_ptr.vmem [resolvable:$true] %s62
      %68 = dma.hbm_to_vmem [thread:$0]  %s3, 512, %s63, [#allocation9], 64, 64, 4
    $region17: #{tpu_custom_call.1} parent=1 // pred_fallthru
      _
    // Predicated region
    $region18: #{tpu_custom_call.1} parent=1 // pred_check
      _
    $region19: #{tpu_custom_call.1} parent=1 // pred_check_branch
      %70 = sbr.rel (0) target = $region21
    $region20: #{tpu_custom_call.1} parent=1 // pred_region
      _
    $region21: #{tpu_custom_call.1} parent=1 // pred_fallthru
      _
    // Predicated region
    $region22: #{tpu_custom_call.1} parent=1 // pred_check
      _
    $region23: #{tpu_custom_call.1} parent=1 // pred_check_branch
      %72 = sbr.rel (0) target = $region25
    $region24: #{tpu_custom_call.1} parent=1 // pred_region
      %s74 = ssub.s32 512, 512
      %75 = vsyncadd [#allocation9], %s74
      %s76 = sshll.u32 [#allocation10], 4
      %s77 = int_to_ptr.vmem [resolvable:$true] %s76
      %82 = dma.hbm_to_vmem [thread:$0]  %s5, 512, %s77, [#allocation9], 64, 64, 4
    $region25: #{tpu_custom_call.1} parent=1 // pred_fallthru
      _
    // Predicated region
    $region26: #{tpu_custom_call.1} parent=1 // pred_check
      _
    $region27: #{tpu_custom_call.1} parent=1 // pred_check_branch
      %84 = sbr.rel (0) target = $region29
    $region28: #{tpu_custom_call.1} parent=1 // pred_region
      _
    $region29: #{tpu_custom_call.1} parent=1 // pred_fallthru
      _
    // Predicated region
    $region30: #{tpu_custom_call.1} parent=1 // pred_check
      _
    $region31: #{tpu_custom_call.1} parent=1 // pred_check_branch
      %86 = sbr.rel (0) target = $region33
    $region32: #{tpu_custom_call.1} parent=1 // pred_region
      %s88 = ssub.s32 512, 512
      %89 = vsyncadd [#allocation12], %s88
      %s90 = sshll.u32 [#allocation11], 4
      %s91 = int_to_ptr.vmem [resolvable:$true] %s90
      %96 = dma.hbm_to_vmem [thread:$0]  %s7, 512, %s91, [#allocation12], 64, 64, 4
    $region33: #{tpu_custom_call.1} parent=1 // pred_fallthru
      _
    // Predicated region
    $region34: #{tpu_custom_call.1} parent=1 // pred_check
      _
    $region35: #{tpu_custom_call.1} parent=1 // pred_check_branch
      %98 = sbr.rel (0) target = $region37
    $region36: #{tpu_custom_call.1} parent=1 // pred_region
      _
    $region37: #{tpu_custom_call.1} parent=1 // pred_fallthru
      _
    // Predicated region
    $region38: #{tpu_custom_call.1} parent=1 // pred_check
      _
    $region39: #{tpu_custom_call.1} parent=1 // pred_check_branch
      %100 = sbr.rel (0) target = $region41
    $region40: #{tpu_custom_call.1} parent=1 // pred_region
      %s102 = ssub.s32 512, 512
      %103 = vsyncadd [#allocation12], %s102
      %s104 = sshll.u32 [#allocation13], 4
      %s105 = int_to_ptr.vmem [resolvable:$true] %s104
      %110 = dma.hbm_to_vmem [thread:$0]  %s9, 512, %s105, [#allocation12], 64, 64, 4
    $region41: #{tpu_custom_call.1} parent=1 // pred_fallthru
      _
    // Predicated region
    $region42: #{tpu_custom_call.1} parent=1 // pred_check
      _
    $region43: #{tpu_custom_call.1} parent=1 // pred_check_branch
      %112 = sbr.rel (0) target = $region45
    $region44: #{tpu_custom_call.1} parent=1 // pred_region
      _
    $region45: #{tpu_custom_call.1} parent=1 // pred_fallthru
      _
    // Predicated region
    $region46: #{tpu_custom_call.1} parent=1 // pred_check
      _
    $region47: #{tpu_custom_call.1} parent=1 // pred_check_branch
      %114 = sbr.rel (0) target = $region49
    $region48: #{tpu_custom_call.1} parent=1 // pred_region
      %115 = dma.done [#allocation3], 256
    $region49: #{tpu_custom_call.1} parent=1 // pred_fallthru
      _
    // Predicated region
    $region50: #{tpu_custom_call.1} parent=1 // pred_check
      _
    $region51: #{tpu_custom_call.1} parent=1 // pred_check_branch
      %117 = sbr.rel (0) target = $region53
    $region52: #{tpu_custom_call.1} parent=1 // pred_region
      %118 = dma.done [#allocation6], 256
    $region53: #{tpu_custom_call.1} parent=1 // pred_fallthru
      _
    // Predicated region
    $region54: #{tpu_custom_call.1} parent=1 // pred_check
      _
    $region55: #{tpu_custom_call.1} parent=1 // pred_check_branch
      %120 = sbr.rel (0) target = $region57
    $region56: #{tpu_custom_call.1} parent=1 // pred_region
      %121 = dma.done [#allocation6], 256
    $region57: #{tpu_custom_call.1} parent=1 // pred_fallthru
      _
    // Predicated region
    $region58: #{tpu_custom_call.1} parent=1 // pred_check
      _
    $region59: #{tpu_custom_call.1} parent=1 // pred_check_branch
      %123 = sbr.rel (0) target = $region61
    $region60: #{tpu_custom_call.1} parent=1 // pred_region
      %124 = dma.done [#allocation9], 512
    $region61: #{tpu_custom_call.1} parent=1 // pred_fallthru
      _
    // Predicated region
    $region62: #{tpu_custom_call.1} parent=1 // pred_check
      _
    $region63: #{tpu_custom_call.1} parent=1 // pred_check_branch
      %126 = sbr.rel (0) target = $region65
    $region64: #{tpu_custom_call.1} parent=1 // pred_region
      %127 = dma.done [#allocation9], 512
    $region65: #{tpu_custom_call.1} parent=1 // pred_fallthru
      _
    // Predicated region
    $region66: #{tpu_custom_call.1} parent=1 // pred_check
      _
    $region67: #{tpu_custom_call.1} parent=1 // pred_check_branch
      %129 = sbr.rel (0) target = $region69
    $region68: #{tpu_custom_call.1} parent=1 // pred_region
      %130 = dma.done [#allocation12], 512
    $region69: #{tpu_custom_call.1} parent=1 // pred_fallthru
      _
    // Predicated region
    $region70: #{tpu_custom_call.1} parent=1 // pred_check
      _
    $region71: #{tpu_custom_call.1} parent=1 // pred_check_branch
      %132 = sbr.rel (0) target = $region73
    $region72: #{tpu_custom_call.1} parent=1 // pred_region
      %133 = dma.done [#allocation12], 512
    $region73: #{tpu_custom_call.1} parent=1 // pred_fallthru
      _
    %v135 = vld [vmem:[#allocation2] sm:$0xff]
    %v136 = vld [vmem:[#allocation2 + $0x8] sm:$0xff]
    %v137 = vpack.c.bf16 %v136, %v135
    %v138 = vld [vmem:[#allocation8] sm:$0xf]
    %v139 = vld [vmem:[#allocation8 + $0x4] sm:$0xf]
    %v140 = vld [vmem:[#allocation8 + $0x8] sm:$0xf]
    %v141 = vld [vmem:[#allocation8 + $0xc] sm:$0xf]
    %v142 = vld [vmem:[#allocation8 + $0x10] sm:$0xf]
    %v143 = vld [vmem:[#allocation8 + $0x14] sm:$0xf]
    %v144 = vld [vmem:[#allocation8 + $0x18] sm:$0xf]
    %v145 = vld [vmem:[#allocation8 + $0x1c] sm:$0xf]
    %v146 = vld [vmem:[%s4] sm:$0x1]
    %v148 = vlaneseq
    %v149 = vshrl.u32 %v148, 7
    %v150 = vsub.s32 0, %v149
    %v151 = vrot.slane %v146, %v150
    %v161 = vunpack.c.l.b16 %v138
    %v162 = vunpack.c.l.b16 %v139
    %v163 = vunpack.c.l.b16 %v140
    %v164 = vunpack.c.l.b16 %v141
    %v165 = vunpack.c.l.b16 %v142
    %v166 = vunpack.c.l.b16 %v143
    %v167 = vunpack.c.l.b16 %v144
    %v168 = vunpack.c.l.b16 %v145
    %v169 = vpack.c.b16 %v162, %v161
    %v170 = vpack.c.b16 %v164, %v163
    %v171 = vpack.c.b16 %v166, %v165
    %v172 = vpack.c.b16 %v168, %v167
    %vm177 = vcmask 523264
    %v179 = vsel %vm177, %v137, 0
    %181 = vmatprep.subr.bf16.mxu0 0
    %182 = vmatpush1.bf16.msra.mxu0 0
    %183 = vmatprep.subr.bf16.mxu0 0
    %184 = vmatpush1.bf16.msra.mxu0 0
    %185 = vmatprep.subr.bf16.mxu0 0
    %186 = vmatpush1.bf16.msra.mxu0 0
    %187 = vmatprep.subr.bf16.mxu0 0
    %188 = vmatpush1.bf16.msra.mxu0 0
    %189 = vmatprep.subr.bf16.mxu0 0
    %190 = vmatpush1.bf16.msra.mxu0 %v172
    %191 = vmatprep.subr.bf16.mxu0 0
    %192 = vmatpush1.bf16.msra.mxu0 %v171
    %193 = vmatprep.subr.bf16.mxu0 0
    %194 = vmatpush1.bf16.msra.mxu0 %v170
    %195 = vmatprep.subr.bf16.mxu0 0
    %196 = vmatpush1.bf16.msra.mxu0 %v169
    %197 = vmatprep.subr.bf16.mxu0 0
    %198 = vmatpush2.bf16.msra.mxu0 0
    %199 = vmatprep.subr.bf16.mxu0 0
    %200 = vmatpush2.bf16.msra.mxu0 0
    %201 = vmatprep.subr.bf16.mxu0 0
    %202 = vmatpush2.bf16.msra.mxu0 0
    %203 = vmatprep.subr.bf16.mxu0 0
    %204 = vmatpush2.bf16.msra.mxu0 0
    %205 = vmatprep.subr.bf16.mxu0 0
    %206 = vmatpush2.bf16.msra.mxu0 0
    %207 = vmatprep.subr.bf16.mxu0 0
    %208 = vmatpush2.bf16.msra.mxu0 0
    %209 = vmatprep.subr.bf16.mxu0 0
    %210 = vmatpush2.bf16.msra.mxu0 0
    %211 = vmatprep.subr.bf16.mxu0 0
    %212 = vmatpush2.bf16.msra.mxu0 0
    %213 = vmatprep.mubr.bf16.mxu0 0
    %214 = vmatmul.mubr.bf16.gmra.mxu0 %v179
    %v215 = vpop.f32.mrf.mxu0
    %v216 = vadd.f32 %v151, %v215
    %v217 = vpop.f32.mrf.mxu0
    %v218 = vpop.f32.mrf.mxu0
    %v219 = vadd.f32 %v151, %v218
    %v220 = vpop.f32.mrf.mxu0
    %221 = vdwg.mxu0
    %v222 = vld [vmem:[#allocation5] sm:$0xff]
    %v223 = vld [vmem:[#allocation5 + $0x8] sm:$0xff]
    %v224 = vpack.c.bf16 %v223, %v222
    %v225 = vld [vmem:[#allocation10] sm:$0xf]
    %v226 = vld [vmem:[#allocation10 + $0x4] sm:$0xf]
    %v227 = vld [vmem:[#allocation10 + $0x8] sm:$0xf]
    %v228 = vld [vmem:[#allocation10 + $0xc] sm:$0xf]
    %v229 = vld [vmem:[#allocation10 + $0x10] sm:$0xf]
    %v230 = vld [vmem:[#allocation10 + $0x14] sm:$0xf]
    %v231 = vld [vmem:[#allocation10 + $0x18] sm:$0xf]
    %v232 = vld [vmem:[#allocation10 + $0x1c] sm:$0xf]
    %v233 = vld [vmem:[%s6] sm:$0x1]
    %v235 = vlaneseq
    %v236 = vshrl.u32 %v235, 7
    %v237 = vsub.s32 0, %v236
    %v238 = vrot.slane %v233, %v237
    %v248 = vunpack.c.l.b16 %v225
    %v249 = vunpack.c.l.b16 %v226
    %v250 = vunpack.c.l.b16 %v227
    %v251 = vunpack.c.l.b16 %v228
    %v252 = vunpack.c.l.b16 %v229
    %v253 = vunpack.c.l.b16 %v230
    %v254 = vunpack.c.l.b16 %v231
    %v255 = vunpack.c.l.b16 %v232
    %v256 = vpack.c.b16 %v249, %v248
    %v257 = vpack.c.b16 %v251, %v250
    %v258 = vpack.c.b16 %v253, %v252
    %v259 = vpack.c.b16 %v255, %v254
    %v265 = vsel %vm177, %v224, 0
    %267 = vmatprep.subr.bf16.mxu0 0
    %268 = vmatpush1.bf16.msra.mxu0 0
    %269 = vmatprep.subr.bf16.mxu0 0
    %270 = vmatpush1.bf16.msra.mxu0 0
    %271 = vmatprep.subr.bf16.mxu0 0
    %272 = vmatpush1.bf16.msra.mxu0 0
    %273 = vmatprep.subr.bf16.mxu0 0
    %274 = vmatpush1.bf16.msra.mxu0 0
    %275 = vmatprep.subr.bf16.mxu0 0
    %276 = vmatpush1.bf16.msra.mxu0 %v259
    %277 = vmatprep.subr.bf16.mxu0 0
    %278 = vmatpush1.bf16.msra.mxu0 %v258
    %279 = vmatprep.subr.bf16.mxu0 0
    %280 = vmatpush1.bf16.msra.mxu0 %v257
    %281 = vmatprep.subr.bf16.mxu0 0
    %282 = vmatpush1.bf16.msra.mxu0 %v256
    %283 = vmatprep.subr.bf16.mxu0 0
    %284 = vmatpush2.bf16.msra.mxu0 0
    %285 = vmatprep.subr.bf16.mxu0 0
    %286 = vmatpush2.bf16.msra.mxu0 0
    %287 = vmatprep.subr.bf16.mxu0 0
    %288 = vmatpush2.bf16.msra.mxu0 0
    %289 = vmatprep.subr.bf16.mxu0 0
    %290 = vmatpush2.bf16.msra.mxu0 0
    %291 = vmatprep.subr.bf16.mxu0 0
    %292 = vmatpush2.bf16.msra.mxu0 0
    %293 = vmatprep.subr.bf16.mxu0 0
    %294 = vmatpush2.bf16.msra.mxu0 0
    %295 = vmatprep.subr.bf16.mxu0 0
    %296 = vmatpush2.bf16.msra.mxu0 0
    %297 = vmatprep.subr.bf16.mxu0 0
    %298 = vmatpush2.bf16.msra.mxu0 0
    %299 = vmatprep.mubr.bf16.mxu0 0
    %300 = vmatmul.mubr.bf16.gmra.mxu0 %v265
    %v301 = vpop.f32.mrf.mxu0
    %v302 = vadd.f32 %v238, %v301
    %v303 = vpop.f32.mrf.mxu0
    %v304 = vpop.f32.mrf.mxu0
    %v305 = vadd.f32 %v238, %v304
    %v306 = vpop.f32.mrf.mxu0
    %307 = vdwg.mxu0
    %v308 = vld [vmem:[#allocation7] sm:$0xff]
    %v309 = vld [vmem:[#allocation7 + $0x8] sm:$0xff]
    %v310 = vpack.c.bf16 %v309, %v308
    %v311 = vld [vmem:[#allocation11] sm:$0xf]
    %v312 = vld [vmem:[#allocation11 + $0x4] sm:$0xf]
    %v313 = vld [vmem:[#allocation11 + $0x8] sm:$0xf]
    %v314 = vld [vmem:[#allocation11 + $0xc] sm:$0xf]
    %v315 = vld [vmem:[#allocation11 + $0x10] sm:$0xf]
    %v316 = vld [vmem:[#allocation11 + $0x14] sm:$0xf]
    %v317 = vld [vmem:[#allocation11 + $0x18] sm:$0xf]
    %v318 = vld [vmem:[#allocation11 + $0x1c] sm:$0xf]
    %v319 = vld [vmem:[%s8] sm:$0x1]
    %v321 = vlaneseq
    %v322 = vshrl.u32 %v321, 7
    %v323 = vsub.s32 0, %v322
    %v324 = vrot.slane %v319, %v323
    %v334 = vunpack.c.l.b16 %v311
    %v335 = vunpack.c.l.b16 %v312
    %v336 = vunpack.c.l.b16 %v313
    %v337 = vunpack.c.l.b16 %v314
    %v338 = vunpack.c.l.b16 %v315
    %v339 = vunpack.c.l.b16 %v316
    %v340 = vunpack.c.l.b16 %v317
    %v341 = vunpack.c.l.b16 %v318
    %v342 = vpack.c.b16 %v335, %v334
    %v343 = vpack.c.b16 %v337, %v336
    %v344 = vpack.c.b16 %v339, %v338
    %v345 = vpack.c.b16 %v341, %v340
    %v351 = vsel %vm177, %v310, 0
    %353 = vmatprep.subr.bf16.mxu0 0
    %354 = vmatpush1.bf16.msra.mxu0 0
    %355 = vmatprep.subr.bf16.mxu0 0
    %356 = vmatpush1.bf16.msra.mxu0 0
    %357 = vmatprep.subr.bf16.mxu0 0
    %358 = vmatpush1.bf16.msra.mxu0 0
    %359 = vmatprep.subr.bf16.mxu0 0
    %360 = vmatpush1.bf16.msra.mxu0 0
    %361 = vmatprep.subr.bf16.mxu0 0
    %362 = vmatpush1.bf16.msra.mxu0 %v345
    %363 = vmatprep.subr.bf16.mxu0 0
    %364 = vmatpush1.bf16.msra.mxu0 %v344
    %365 = vmatprep.subr.bf16.mxu0 0
    %366 = vmatpush1.bf16.msra.mxu0 %v343
    %367 = vmatprep.subr.bf16.mxu0 0
    %368 = vmatpush1.bf16.msra.mxu0 %v342
    %369 = vmatprep.subr.bf16.mxu0 0
    %370 = vmatpush2.bf16.msra.mxu0 0
    %371 = vmatprep.subr.bf16.mxu0 0
    %372 = vmatpush2.bf16.msra.mxu0 0
    %373 = vmatprep.subr.bf16.mxu0 0
    %374 = vmatpush2.bf16.msra.mxu0 0
    %375 = vmatprep.subr.bf16.mxu0 0
    %376 = vmatpush2.bf16.msra.mxu0 0
    %377 = vmatprep.subr.bf16.mxu0 0
    %378 = vmatpush2.bf16.msra.mxu0 0
    %379 = vmatprep.subr.bf16.mxu0 0
    %380 = vmatpush2.bf16.msra.mxu0 0
    %381 = vmatprep.subr.bf16.mxu0 0
    %382 = vmatpush2.bf16.msra.mxu0 0
    %383 = vmatprep.subr.bf16.mxu0 0
    %384 = vmatpush2.bf16.msra.mxu0 0
    %385 = vmatprep.mubr.bf16.mxu0 0
    %386 = vmatmul.mubr.bf16.gmra.mxu0 %v351
    %v387 = vpop.f32.mrf.mxu0
    %v388 = vadd.f32 %v324, %v387
    %v389 = vpop.f32.mrf.mxu0
    %v390 = vpop.f32.mrf.mxu0
    %v391 = vadd.f32 %v324, %v390
    %v392 = vpop.f32.mrf.mxu0
    %393 = vdwg.mxu0
    %396 = vrot.lane.b32.xlu0 %v216, 112
    %v397 = vpop.permute.xlu0 %396
    %398 = vrot.lane.b32.xlu0 %v219, 112
    %v399 = vpop.permute.xlu0 %398
    %402 = vrot.lane.b32.xlu0 %v216, 96
    %v403 = vpop.permute.xlu0 %402
    %404 = vrot.lane.b32.xlu0 %v219, 96
    %v405 = vpop.permute.xlu0 %404
    %408 = vrot.lane.b32.xlu0 %v216, 80
    %v409 = vpop.permute.xlu0 %408
    %410 = vrot.lane.b32.xlu0 %v219, 80
    %v411 = vpop.permute.xlu0 %410
    %v414 = vpack.c.bf16 %v216, %v216
    %v415 = vpack.c.bf16 %v219, %v219
    %v416 = vpack.c.bf16 %v397, %v397
    %v417 = vpack.c.bf16 %v399, %v399
    %v418 = vpack.c.bf16 %v403, %v403
    %v419 = vpack.c.bf16 %v405, %v405
    %v420 = vpack.c.bf16 %v409, %v409
    %v421 = vpack.c.bf16 %v411, %v411
    %424 = vrot.lane.b32.xlu0 %v302, 112
    %v425 = vpop.permute.xlu0 %424
    %426 = vrot.lane.b32.xlu0 %v305, 112
    %v427 = vpop.permute.xlu0 %426
    %430 = vrot.lane.b32.xlu0 %v302, 96
    %v431 = vpop.permute.xlu0 %430
    %432 = vrot.lane.b32.xlu0 %v305, 96
    %v433 = vpop.permute.xlu0 %432
    %436 = vrot.lane.b32.xlu0 %v302, 80
    %v437 = vpop.permute.xlu0 %436
    %438 = vrot.lane.b32.xlu0 %v305, 80
    %v439 = vpop.permute.xlu0 %438
    %v442 = vpack.c.bf16 %v302, %v302
    %v443 = vpack.c.bf16 %v305, %v305
    %v444 = vpack.c.bf16 %v425, %v425
    %v445 = vpack.c.bf16 %v427, %v427
    %v446 = vpack.c.bf16 %v431, %v431
    %v447 = vpack.c.bf16 %v433, %v433
    %v448 = vpack.c.bf16 %v437, %v437
    %v449 = vpack.c.bf16 %v439, %v439
    %452 = vrot.lane.b32.xlu0 %v388, 112
    %v453 = vpop.permute.xlu0 %452
    %454 = vrot.lane.b32.xlu0 %v391, 112
    %v455 = vpop.permute.xlu0 %454
    %458 = vrot.lane.b32.xlu0 %v388, 96
    %v459 = vpop.permute.xlu0 %458
    %460 = vrot.lane.b32.xlu0 %v391, 96
    %v461 = vpop.permute.xlu0 %460
    %464 = vrot.lane.b32.xlu0 %v388, 80
    %v465 = vpop.permute.xlu0 %464
    %466 = vrot.lane.b32.xlu0 %v391, 80
    %v467 = vpop.permute.xlu0 %466
    %v470 = vpack.c.bf16 %v388, %v388
    %v471 = vpack.c.bf16 %v391, %v391
    %v472 = vpack.c.bf16 %v453, %v453
    %v473 = vpack.c.bf16 %v455, %v455
    %v474 = vpack.c.bf16 %v459, %v459
    %v475 = vpack.c.bf16 %v461, %v461
    %v476 = vpack.c.bf16 %v465, %v465
    %v477 = vpack.c.bf16 %v467, %v467
    %vm478 = vcmask 130048
    %v480 = vsel %vm478, %v414, 0
    %v483 = vsel %vm478, %v442, 0
    %485 = vmatprep.subr.bf16.mxu0 0
    %486 = vmatpush1.bf16.xpose.msra.mxu0 0
    %487 = vmatprep.subr.bf16.mxu0 0
    %488 = vmatpush1.bf16.xpose.msra.mxu0 0
    %489 = vmatprep.subr.bf16.mxu0 0
    %490 = vmatpush1.bf16.xpose.msra.mxu0 0
    %491 = vmatprep.subr.bf16.mxu0 0
    %492 = vmatpush1.bf16.xpose.msra.mxu0 0
    %493 = vmatprep.subr.bf16.mxu0 0
    %494 = vmatpush1.bf16.xpose.msra.mxu0 0
    %495 = vmatprep.subr.bf16.mxu0 0
    %496 = vmatpush1.bf16.xpose.msra.mxu0 0
    %497 = vmatprep.subr.bf16.mxu0 0
    %498 = vmatpush1.bf16.xpose.msra.mxu0 0
    %499 = vmatprep.subr.bf16.mxu0 0
    %500 = vmatpush1.bf16.xpose.msra.mxu0 %v483
    %501 = vmatprep.subr.bf16.mxu0 0
    %502 = vmatpush2.bf16.xpose.msra.mxu0 0
    %503 = vmatprep.subr.bf16.mxu0 0
    %504 = vmatpush2.bf16.xpose.msra.mxu0 0
    %505 = vmatprep.subr.bf16.mxu0 0
    %506 = vmatpush2.bf16.xpose.msra.mxu0 0
    %507 = vmatprep.subr.bf16.mxu0 0
    %508 = vmatpush2.bf16.xpose.msra.mxu0 0
    %509 = vmatprep.subr.bf16.mxu0 0
    %510 = vmatpush2.bf16.xpose.msra.mxu0 0
    %511 = vmatprep.subr.bf16.mxu0 0
    %512 = vmatpush2.bf16.xpose.msra.mxu0 0
    %513 = vmatprep.subr.bf16.mxu0 0
    %514 = vmatpush2.bf16.xpose.msra.mxu0 0
    %515 = vmatprep.subr.bf16.mxu0 0
    %516 = vmatpush2.bf16.xpose.msra.mxu0 0
    %517 = vmatprep.mubr.bf16.mxu0 0
    %518 = vmatmul.mubr.bf16.gmra.mxu0 %v480
    %v519 = vpop.f32.mrf.mxu0
    %v520 = vadd.f32 0.0, %v519
    %v521 = vpop.f32.mrf.mxu0
    %v522 = vpop.f32.mrf.mxu0
    %v523 = vpop.f32.mrf.mxu0
    %524 = vdwg.mxu0
    %v526 = vsel %vm478, %v415, 0
    %v529 = vsel %vm478, %v443, 0
    %531 = vmatprep.subr.bf16.mxu0 0
    %532 = vmatpush1.bf16.xpose.msra.mxu0 0
    %533 = vmatprep.subr.bf16.mxu0 0
    %534 = vmatpush1.bf16.xpose.msra.mxu0 0
    %535 = vmatprep.subr.bf16.mxu0 0
    %536 = vmatpush1.bf16.xpose.msra.mxu0 0
    %537 = vmatprep.subr.bf16.mxu0 0
    %538 = vmatpush1.bf16.xpose.msra.mxu0 0
    %539 = vmatprep.subr.bf16.mxu0 0
    %540 = vmatpush1.bf16.xpose.msra.mxu0 0
    %541 = vmatprep.subr.bf16.mxu0 0
    %542 = vmatpush1.bf16.xpose.msra.mxu0 0
    %543 = vmatprep.subr.bf16.mxu0 0
    %544 = vmatpush1.bf16.xpose.msra.mxu0 0
    %545 = vmatprep.subr.bf16.mxu0 0
    %546 = vmatpush1.bf16.xpose.msra.mxu0 %v529
    %547 = vmatprep.subr.bf16.mxu0 0
    %548 = vmatpush2.bf16.xpose.msra.mxu0 0
    %549 = vmatprep.subr.bf16.mxu0 0
    %550 = vmatpush2.bf16.xpose.msra.mxu0 0
    %551 = vmatprep.subr.bf16.mxu0 0
    %552 = vmatpush2.bf16.xpose.msra.mxu0 0
    %553 = vmatprep.subr.bf16.mxu0 0
    %554 = vmatpush2.bf16.xpose.msra.mxu0 0
    %555 = vmatprep.subr.bf16.mxu0 0
    %556 = vmatpush2.bf16.xpose.msra.mxu0 0
    %557 = vmatprep.subr.bf16.mxu0 0
    %558 = vmatpush2.bf16.xpose.msra.mxu0 0
    %559 = vmatprep.subr.bf16.mxu0 0
    %560 = vmatpush2.bf16.xpose.msra.mxu0 0
    %561 = vmatprep.subr.bf16.mxu0 0
    %562 = vmatpush2.bf16.xpose.msra.mxu0 0
    %563 = vmatprep.mubr.bf16.mxu0 0
    %564 = vmatmul.mubr.bf16.gmra.mxu0 %v526
    %v565 = vpop.f32.mrf.mxu0
    %v566 = vadd.f32 0.0, %v565
    %v567 = vpop.f32.mrf.mxu0
    %v568 = vpop.f32.mrf.mxu0
    %v569 = vpop.f32.mrf.mxu0
    %570 = vdwg.mxu0
    %v572 = vsel %vm478, %v416, 0
    %v575 = vsel %vm478, %v444, 0
    %577 = vmatprep.subr.bf16.mxu0 0
    %578 = vmatpush1.bf16.xpose.msra.mxu0 0
    %579 = vmatprep.subr.bf16.mxu0 0
    %580 = vmatpush1.bf16.xpose.msra.mxu0 0
    %581 = vmatprep.subr.bf16.mxu0 0
    %582 = vmatpush1.bf16.xpose.msra.mxu0 0
    %583 = vmatprep.subr.bf16.mxu0 0
    %584 = vmatpush1.bf16.xpose.msra.mxu0 0
    %585 = vmatprep.subr.bf16.mxu0 0
    %586 = vmatpush1.bf16.xpose.msra.mxu0 0
    %587 = vmatprep.subr.bf16.mxu0 0
    %588 = vmatpush1.bf16.xpose.msra.mxu0 0
    %589 = vmatprep.subr.bf16.mxu0 0
    %590 = vmatpush1.bf16.xpose.msra.mxu0 0
    %591 = vmatprep.subr.bf16.mxu0 0
    %592 = vmatpush1.bf16.xpose.msra.mxu0 %v575
    %593 = vmatprep.subr.bf16.mxu0 0
    %594 = vmatpush2.bf16.xpose.msra.mxu0 0
    %595 = vmatprep.subr.bf16.mxu0 0
    %596 = vmatpush2.bf16.xpose.msra.mxu0 0
    %597 = vmatprep.subr.bf16.mxu0 0
    %598 = vmatpush2.bf16.xpose.msra.mxu0 0
    %599 = vmatprep.subr.bf16.mxu0 0
    %600 = vmatpush2.bf16.xpose.msra.mxu0 0
    %601 = vmatprep.subr.bf16.mxu0 0
    %602 = vmatpush2.bf16.xpose.msra.mxu0 0
    %603 = vmatprep.subr.bf16.mxu0 0
    %604 = vmatpush2.bf16.xpose.msra.mxu0 0
    %605 = vmatprep.subr.bf16.mxu0 0
    %606 = vmatpush2.bf16.xpose.msra.mxu0 0
    %607 = vmatprep.subr.bf16.mxu0 0
    %608 = vmatpush2.bf16.xpose.msra.mxu0 0
    %609 = vmatprep.mubr.bf16.mxu0 0
    %610 = vmatmul.mubr.bf16.gmra.mxu0 %v572
    %v611 = vpop.f32.mrf.mxu0
    %v612 = vadd.f32 0.0, %v611
    %v613 = vpop.f32.mrf.mxu0
    %v614 = vpop.f32.mrf.mxu0
    %v615 = vpop.f32.mrf.mxu0
    %616 = vdwg.mxu0
    %v618 = vsel %vm478, %v417, 0
    %v621 = vsel %vm478, %v445, 0
    %623 = vmatprep.subr.bf16.mxu0 0
    %624 = vmatpush1.bf16.xpose.msra.mxu0 0
    %625 = vmatprep.subr.bf16.mxu0 0
    %626 = vmatpush1.bf16.xpose.msra.mxu0 0
    %627 = vmatprep.subr.bf16.mxu0 0
    %628 = vmatpush1.bf16.xpose.msra.mxu0 0
    %629 = vmatprep.subr.bf16.mxu0 0
    %630 = vmatpush1.bf16.xpose.msra.mxu0 0
    %631 = vmatprep.subr.bf16.mxu0 0
    %632 = vmatpush1.bf16.xpose.msra.mxu0 0
    %633 = vmatprep.subr.bf16.mxu0 0
    %634 = vmatpush1.bf16.xpose.msra.mxu0 0
    %635 = vmatprep.subr.bf16.mxu0 0
    %636 = vmatpush1.bf16.xpose.msra.mxu0 0
    %637 = vmatprep.subr.bf16.mxu0 0
    %638 = vmatpush1.bf16.xpose.msra.mxu0 %v621
    %639 = vmatprep.subr.bf16.mxu0 0
    %640 = vmatpush2.bf16.xpose.msra.mxu0 0
    %641 = vmatprep.subr.bf16.mxu0 0
    %642 = vmatpush2.bf16.xpose.msra.mxu0 0
    %643 = vmatprep.subr.bf16.mxu0 0
    %644 = vmatpush2.bf16.xpose.msra.mxu0 0
    %645 = vmatprep.subr.bf16.mxu0 0
    %646 = vmatpush2.bf16.xpose.msra.mxu0 0
    %647 = vmatprep.subr.bf16.mxu0 0
    %648 = vmatpush2.bf16.xpose.msra.mxu0 0
    %649 = vmatprep.subr.bf16.mxu0 0
    %650 = vmatpush2.bf16.xpose.msra.mxu0 0
    %651 = vmatprep.subr.bf16.mxu0 0
    %652 = vmatpush2.bf16.xpose.msra.mxu0 0
    %653 = vmatprep.subr.bf16.mxu0 0
    %654 = vmatpush2.bf16.xpose.msra.mxu0 0
    %655 = vmatprep.mubr.bf16.mxu0 0
    %656 = vmatmul.mubr.bf16.gmra.mxu0 %v618
    %v657 = vpop.f32.mrf.mxu0
    %v658 = vadd.f32 0.0, %v657
    %v659 = vpop.f32.mrf.mxu0
    %v660 = vpop.f32.mrf.mxu0
    %v661 = vpop.f32.mrf.mxu0
    %662 = vdwg.mxu0
    %v664 = vsel %vm478, %v418, 0
    %v667 = vsel %vm478, %v446, 0
    %669 = vmatprep.subr.bf16.mxu0 0
    %670 = vmatpush1.bf16.xpose.msra.mxu0 0
    %671 = vmatprep.subr.bf16.mxu0 0
    %672 = vmatpush1.bf16.xpose.msra.mxu0 0
    %673 = vmatprep.subr.bf16.mxu0 0
    %674 = vmatpush1.bf16.xpose.msra.mxu0 0
    %675 = vmatprep.subr.bf16.mxu0 0
    %676 = vmatpush1.bf16.xpose.msra.mxu0 0
    %677 = vmatprep.subr.bf16.mxu0 0
    %678 = vmatpush1.bf16.xpose.msra.mxu0 0
    %679 = vmatprep.subr.bf16.mxu0 0
    %680 = vmatpush1.bf16.xpose.msra.mxu0 0
    %681 = vmatprep.subr.bf16.mxu0 0
    %682 = vmatpush1.bf16.xpose.msra.mxu0 0
    %683 = vmatprep.subr.bf16.mxu0 0
    %684 = vmatpush1.bf16.xpose.msra.mxu0 %v667
    %685 = vmatprep.subr.bf16.mxu0 0
    %686 = vmatpush2.bf16.xpose.msra.mxu0 0
    %687 = vmatprep.subr.bf16.mxu0 0
    %688 = vmatpush2.bf16.xpose.msra.mxu0 0
    %689 = vmatprep.subr.bf16.mxu0 0
    %690 = vmatpush2.bf16.xpose.msra.mxu0 0
    %691 = vmatprep.subr.bf16.mxu0 0
    %692 = vmatpush2.bf16.xpose.msra.mxu0 0
    %693 = vmatprep.subr.bf16.mxu0 0
    %694 = vmatpush2.bf16.xpose.msra.mxu0 0
    %695 = vmatprep.subr.bf16.mxu0 0
    %696 = vmatpush2.bf16.xpose.msra.mxu0 0
    %697 = vmatprep.subr.bf16.mxu0 0
    %698 = vmatpush2.bf16.xpose.msra.mxu0 0
    %699 = vmatprep.subr.bf16.mxu0 0
    %700 = vmatpush2.bf16.xpose.msra.mxu0 0
    %701 = vmatprep.mubr.bf16.mxu0 0
    %702 = vmatmul.mubr.bf16.gmra.mxu0 %v664
    %v703 = vpop.f32.mrf.mxu0
    %v704 = vadd.f32 0.0, %v703
    %v705 = vpop.f32.mrf.mxu0
    %v706 = vpop.f32.mrf.mxu0
    %v707 = vpop.f32.mrf.mxu0
    %708 = vdwg.mxu0
    %v710 = vsel %vm478, %v419, 0
    %v713 = vsel %vm478, %v447, 0
    %715 = vmatprep.subr.bf16.mxu0 0
    %716 = vmatpush1.bf16.xpose.msra.mxu0 0
    %717 = vmatprep.subr.bf16.mxu0 0
    %718 = vmatpush1.bf16.xpose.msra.mxu0 0
    %719 = vmatprep.subr.bf16.mxu0 0
    %720 = vmatpush1.bf16.xpose.msra.mxu0 0
    %721 = vmatprep.subr.bf16.mxu0 0
    %722 = vmatpush1.bf16.xpose.msra.mxu0 0
    %723 = vmatprep.subr.bf16.mxu0 0
    %724 = vmatpush1.bf16.xpose.msra.mxu0 0
    %725 = vmatprep.subr.bf16.mxu0 0
    %726 = vmatpush1.bf16.xpose.msra.mxu0 0
    %727 = vmatprep.subr.bf16.mxu0 0
    %728 = vmatpush1.bf16.xpose.msra.mxu0 0
    %729 = vmatprep.subr.bf16.mxu0 0
    %730 = vmatpush1.bf16.xpose.msra.mxu0 %v713
    %731 = vmatprep.subr.bf16.mxu0 0
    %732 = vmatpush2.bf16.xpose.msra.mxu0 0
    %733 = vmatprep.subr.bf16.mxu0 0
    %734 = vmatpush2.bf16.xpose.msra.mxu0 0
    %735 = vmatprep.subr.bf16.mxu0 0
    %736 = vmatpush2.bf16.xpose.msra.mxu0 0
    %737 = vmatprep.subr.bf16.mxu0 0
    %738 = vmatpush2.bf16.xpose.msra.mxu0 0
    %739 = vmatprep.subr.bf16.mxu0 0
    %740 = vmatpush2.bf16.xpose.msra.mxu0 0
    %741 = vmatprep.subr.bf16.mxu0 0
    %742 = vmatpush2.bf16.xpose.msra.mxu0 0
    %743 = vmatprep.subr.bf16.mxu0 0
    %744 = vmatpush2.bf16.xpose.msra.mxu0 0
    %745 = vmatprep.subr.bf16.mxu0 0
    %746 = vmatpush2.bf16.xpose.msra.mxu0 0
    %747 = vmatprep.mubr.bf16.mxu0 0
    %748 = vmatmul.mubr.bf16.gmra.mxu0 %v710
    %v749 = vpop.f32.mrf.mxu0
    %v750 = vadd.f32 0.0, %v749
    %v751 = vpop.f32.mrf.mxu0
    %v752 = vpop.f32.mrf.mxu0
    %v753 = vpop.f32.mrf.mxu0
    %754 = vdwg.mxu0
    %v756 = vsel %vm478, %v420, 0
    %v759 = vsel %vm478, %v448, 0
    %761 = vmatprep.subr.bf16.mxu0 0
    %762 = vmatpush1.bf16.xpose.msra.mxu0 0
    %763 = vmatprep.subr.bf16.mxu0 0
    %764 = vmatpush1.bf16.xpose.msra.mxu0 0
    %765 = vmatprep.subr.bf16.mxu0 0
    %766 = vmatpush1.bf16.xpose.msra.mxu0 0
    %767 = vmatprep.subr.bf16.mxu0 0
    %768 = vmatpush1.bf16.xpose.msra.mxu0 0
    %769 = vmatprep.subr.bf16.mxu0 0
    %770 = vmatpush1.bf16.xpose.msra.mxu0 0
    %771 = vmatprep.subr.bf16.mxu0 0
    %772 = vmatpush1.bf16.xpose.msra.mxu0 0
    %773 = vmatprep.subr.bf16.mxu0 0
    %774 = vmatpush1.bf16.xpose.msra.mxu0 0
    %775 = vmatprep.subr.bf16.mxu0 0
    %776 = vmatpush1.bf16.xpose.msra.mxu0 %v759
    %777 = vmatprep.subr.bf16.mxu0 0
    %778 = vmatpush2.bf16.xpose.msra.mxu0 0
    %779 = vmatprep.subr.bf16.mxu0 0
    %780 = vmatpush2.bf16.xpose.msra.mxu0 0
    %781 = vmatprep.subr.bf16.mxu0 0
    %782 = vmatpush2.bf16.xpose.msra.mxu0 0
    %783 = vmatprep.subr.bf16.mxu0 0
    %784 = vmatpush2.bf16.xpose.msra.mxu0 0
    %785 = vmatprep.subr.bf16.mxu0 0
    %786 = vmatpush2.bf16.xpose.msra.mxu0 0
    %787 = vmatprep.subr.bf16.mxu0 0
    %788 = vmatpush2.bf16.xpose.msra.mxu0 0
    %789 = vmatprep.subr.bf16.mxu0 0
    %790 = vmatpush2.bf16.xpose.msra.mxu0 0
    %791 = vmatprep.subr.bf16.mxu0 0
    %792 = vmatpush2.bf16.xpose.msra.mxu0 0
    %793 = vmatprep.mubr.bf16.mxu0 0
    %794 = vmatmul.mubr.bf16.gmra.mxu0 %v756
    %v795 = vpop.f32.mrf.mxu0
    %v796 = vadd.f32 0.0, %v795
    %v797 = vpop.f32.mrf.mxu0
    %v798 = vpop.f32.mrf.mxu0
    %v799 = vpop.f32.mrf.mxu0
    %800 = vdwg.mxu0
    %v802 = vsel %vm478, %v421, 0
    %v805 = vsel %vm478, %v449, 0
    %807 = vmatprep.subr.bf16.mxu0 0
    %808 = vmatpush1.bf16.xpose.msra.mxu0 0
    %809 = vmatprep.subr.bf16.mxu0 0
    %810 = vmatpush1.bf16.xpose.msra.mxu0 0
    %811 = vmatprep.subr.bf16.mxu0 0
    %812 = vmatpush1.bf16.xpose.msra.mxu0 0
    %813 = vmatprep.subr.bf16.mxu0 0
    %814 = vmatpush1.bf16.xpose.msra.mxu0 0
    %815 = vmatprep.subr.bf16.mxu0 0
    %816 = vmatpush1.bf16.xpose.msra.mxu0 0
    %817 = vmatprep.subr.bf16.mxu0 0
    %818 = vmatpush1.bf16.xpose.msra.mxu0 0
    %819 = vmatprep.subr.bf16.mxu0 0
    %820 = vmatpush1.bf16.xpose.msra.mxu0 0
    %821 = vmatprep.subr.bf16.mxu0 0
    %822 = vmatpush1.bf16.xpose.msra.mxu0 %v805
    %823 = vmatprep.subr.bf16.mxu0 0
    %824 = vmatpush2.bf16.xpose.msra.mxu0 0
    %825 = vmatprep.subr.bf16.mxu0 0
    %826 = vmatpush2.bf16.xpose.msra.mxu0 0
    %827 = vmatprep.subr.bf16.mxu0 0
    %828 = vmatpush2.bf16.xpose.msra.mxu0 0
    %829 = vmatprep.subr.bf16.mxu0 0
    %830 = vmatpush2.bf16.xpose.msra.mxu0 0
    %831 = vmatprep.subr.bf16.mxu0 0
    %832 = vmatpush2.bf16.xpose.msra.mxu0 0
    %833 = vmatprep.subr.bf16.mxu0 0
    %834 = vmatpush2.bf16.xpose.msra.mxu0 0
    %835 = vmatprep.subr.bf16.mxu0 0
    %836 = vmatpush2.bf16.xpose.msra.mxu0 0
    %837 = vmatprep.subr.bf16.mxu0 0
    %838 = vmatpush2.bf16.xpose.msra.mxu0 0
    %839 = vmatprep.mubr.bf16.mxu0 0
    %840 = vmatmul.mubr.bf16.gmra.mxu0 %v802
    %v841 = vpop.f32.mrf.mxu0
    %v842 = vadd.f32 0.0, %v841
    %v843 = vpop.f32.mrf.mxu0
    %v844 = vpop.f32.mrf.mxu0
    %v845 = vpop.f32.mrf.mxu0
    %846 = vdwg.mxu0
    %vm847 = vcmask 64512
    %v848 = vsel %vm847, %v520, -inf
    %849 = vmax.xlane.f32.xlu0 %v848
    %v850 = vpop.xlane.xlu0 %849
    %v851 = vsel %vm847, %v566, -inf
    %852 = vmax.xlane.f32.xlu0 %v851
    %v853 = vpop.xlane.xlu0 %852
    %v854 = vsel %vm847, %v612, -inf
    %855 = vmax.xlane.f32.xlu0 %v854
    %v856 = vpop.xlane.xlu0 %855
    %v857 = vsel %vm847, %v658, -inf
    %858 = vmax.xlane.f32.xlu0 %v857
    %v859 = vpop.xlane.xlu0 %858
    %v860 = vsel %vm847, %v704, -inf
    %861 = vmax.xlane.f32.xlu0 %v860
    %v862 = vpop.xlane.xlu0 %861
    %v863 = vsel %vm847, %v750, -inf
    %864 = vmax.xlane.f32.xlu0 %v863
    %v865 = vpop.xlane.xlu0 %864
    %v866 = vsel %vm847, %v796, -inf
    %867 = vmax.xlane.f32.xlu0 %v866
    %v868 = vpop.xlane.xlu0 %867
    %v869 = vsel %vm847, %v842, -inf
    %870 = vmax.xlane.f32.xlu0 %v869
    %v871 = vpop.xlane.xlu0 %870
    %v872 = vsub.f32 %v520, %v850
    %v873 = vsub.f32 %v566, %v853
    %v874 = vsub.f32 %v612, %v856
    %v875 = vsub.f32 %v658, %v859
    %v876 = vsub.f32 %v704, %v862
    %v877 = vsub.f32 %v750, %v865
    %v878 = vsub.f32 %v796, %v868
    %v879 = vsub.f32 %v842, %v871
    %v880 = vmul.f32 %v872, 1.442695
    %v881 = vpow.pop %v880
    %v882 = vmul.f32 %v873, 1.442695
    %v883 = vpow.pop %v882
    %v884 = vmul.f32 %v874, 1.442695
    %v885 = vpow.pop %v884
    %v886 = vmul.f32 %v875, 1.442695
    %v887 = vpow.pop %v886
    %v888 = vmul.f32 %v876, 1.442695
    %v889 = vpow.pop %v888
    %v890 = vmul.f32 %v877, 1.442695
    %v891 = vpow.pop %v890
    %v892 = vmul.f32 %v878, 1.442695
    %v893 = vpow.pop %v892
    %v894 = vmul.f32 %v879, 1.442695
    %v895 = vpow.pop %v894
    %v896 = vsel %vm847, %v881, 0.0
    %897 = vadd.xlane.f32.xlu0 %v896
    %v898 = vpop.xlane.xlu0 %897
    %v899 = vsel %vm847, %v883, 0.0
    %900 = vadd.xlane.f32.xlu0 %v899
    %v901 = vpop.xlane.xlu0 %900
    %v902 = vsel %vm847, %v885, 0.0
    %903 = vadd.xlane.f32.xlu0 %v902
    %v904 = vpop.xlane.xlu0 %903
    %v905 = vsel %vm847, %v887, 0.0
    %906 = vadd.xlane.f32.xlu0 %v905
    %v907 = vpop.xlane.xlu0 %906
    %v908 = vsel %vm847, %v889, 0.0
    %909 = vadd.xlane.f32.xlu0 %v908
    %v910 = vpop.xlane.xlu0 %909
    %v911 = vsel %vm847, %v891, 0.0
    %912 = vadd.xlane.f32.xlu0 %v911
    %v913 = vpop.xlane.xlu0 %912
    %v914 = vsel %vm847, %v893, 0.0
    %915 = vadd.xlane.f32.xlu0 %v914
    %v916 = vpop.xlane.xlu0 %915
    %v917 = vsel %vm847, %v895, 0.0
    %918 = vadd.xlane.f32.xlu0 %v917
    %v919 = vpop.xlane.xlu0 %918
    %v920 = vrcp.pop %v898
    %v921 = vrcp.pop %v901
    %v922 = vrcp.pop %v904
    %v923 = vrcp.pop %v907
    %v924 = vrcp.pop %v910
    %v925 = vrcp.pop %v913
    %v926 = vrcp.pop %v916
    %v927 = vrcp.pop %v919
    %v928 = vmul.f32 %v881, %v920
    %v929 = vmul.f32 %v883, %v921
    %v930 = vmul.f32 %v885, %v922
    %v931 = vmul.f32 %v887, %v923
    %v932 = vmul.f32 %v889, %v924
    %v933 = vmul.f32 %v891, %v925
    %v934 = vmul.f32 %v893, %v926
    %v935 = vmul.f32 %v895, %v927
    %v936 = vpack.c.bf16 %v928, %v928
    %v937 = vpack.c.bf16 %v929, %v929
    %v938 = vpack.c.bf16 %v930, %v930
    %v939 = vpack.c.bf16 %v931, %v931
    %v940 = vpack.c.bf16 %v932, %v932
    %v941 = vpack.c.bf16 %v933, %v933
    %v942 = vpack.c.bf16 %v934, %v934
    %v943 = vpack.c.bf16 %v935, %v935
    %v945 = vsel %vm847, %v936, 0
    %vm947 = vcmask 1043456
    %v949 = vsel %vm947, %v470, 0
    %951 = vmatprep.subr.bf16.mxu0 0
    %952 = vmatpush1.bf16.msra.mxu0 0
    %953 = vmatprep.subr.bf16.mxu0 0
    %954 = vmatpush1.bf16.msra.mxu0 0
    %955 = vmatprep.subr.bf16.mxu0 0
    %956 = vmatpush1.bf16.msra.mxu0 0
    %957 = vmatprep.subr.bf16.mxu0 0
    %958 = vmatpush1.bf16.msra.mxu0 0
    %959 = vmatprep.subr.bf16.mxu0 0
    %960 = vmatpush1.bf16.msra.mxu0 0
    %961 = vmatprep.subr.bf16.mxu0 0
    %962 = vmatpush1.bf16.msra.mxu0 0
    %963 = vmatprep.subr.bf16.mxu0 0
    %964 = vmatpush1.bf16.msra.mxu0 0
    %965 = vmatprep.subr.bf16.mxu0 0
    %966 = vmatpush1.bf16.msra.mxu0 %v949
    %967 = vmatprep.subr.bf16.mxu0 0
    %968 = vmatpush2.bf16.msra.mxu0 0
    %969 = vmatprep.subr.bf16.mxu0 0
    %970 = vmatpush2.bf16.msra.mxu0 0
    %971 = vmatprep.subr.bf16.mxu0 0
    %972 = vmatpush2.bf16.msra.mxu0 0
    %973 = vmatprep.subr.bf16.mxu0 0
    %974 = vmatpush2.bf16.msra.mxu0 0
    %975 = vmatprep.subr.bf16.mxu0 0
    %976 = vmatpush2.bf16.msra.mxu0 0
    %977 = vmatprep.subr.bf16.mxu0 0
    %978 = vmatpush2.bf16.msra.mxu0 0
    %979 = vmatprep.subr.bf16.mxu0 0
    %980 = vmatpush2.bf16.msra.mxu0 0
    %981 = vmatprep.subr.bf16.mxu0 0
    %982 = vmatpush2.bf16.msra.mxu0 0
    %983 = vmatprep.mubr.bf16.mxu0 0
    %984 = vmatmul.mubr.bf16.gmra.mxu0 %v945
    %v985 = vpop.f32.mrf.mxu0
    %v986 = vadd.f32 0.0, %v985
    %v987 = vpop.f32.mrf.mxu0
    %v988 = vpop.f32.mrf.mxu0
    %v989 = vpop.f32.mrf.mxu0
    %990 = vdwg.mxu0
    %v992 = vsel %vm847, %v937, 0
    %v995 = vsel %vm947, %v471, 0
    %997 = vmatprep.subr.bf16.mxu0 0
    %998 = vmatpush1.bf16.msra.mxu0 0
    %999 = vmatprep.subr.bf16.mxu0 0
    %1000 = vmatpush1.bf16.msra.mxu0 0
    %1001 = vmatprep.subr.bf16.mxu0 0
    %1002 = vmatpush1.bf16.msra.mxu0 0
    %1003 = vmatprep.subr.bf16.mxu0 0
    %1004 = vmatpush1.bf16.msra.mxu0 0
    %1005 = vmatprep.subr.bf16.mxu0 0
    %1006 = vmatpush1.bf16.msra.mxu0 0
    %1007 = vmatprep.subr.bf16.mxu0 0
    %1008 = vmatpush1.bf16.msra.mxu0 0
    %1009 = vmatprep.subr.bf16.mxu0 0
    %1010 = vmatpush1.bf16.msra.mxu0 0
    %1011 = vmatprep.subr.bf16.mxu0 0
    %1012 = vmatpush1.bf16.msra.mxu0 %v995
    %1013 = vmatprep.subr.bf16.mxu0 0
    %1014 = vmatpush2.bf16.msra.mxu0 0
    %1015 = vmatprep.subr.bf16.mxu0 0
    %1016 = vmatpush2.bf16.msra.mxu0 0
    %1017 = vmatprep.subr.bf16.mxu0 0
    %1018 = vmatpush2.bf16.msra.mxu0 0
    %1019 = vmatprep.subr.bf16.mxu0 0
    %1020 = vmatpush2.bf16.msra.mxu0 0
    %1021 = vmatprep.subr.bf16.mxu0 0
    %1022 = vmatpush2.bf16.msra.mxu0 0
    %1023 = vmatprep.subr.bf16.mxu0 0
    %1024 = vmatpush2.bf16.msra.mxu0 0
    %1025 = vmatprep.subr.bf16.mxu0 0
    %1026 = vmatpush2.bf16.msra.mxu0 0
    %1027 = vmatprep.subr.bf16.mxu0 0
    %1028 = vmatpush2.bf16.msra.mxu0 0
    %1029 = vmatprep.mubr.bf16.mxu0 0
    %1030 = vmatmul.mubr.bf16.gmra.mxu0 %v992
    %v1031 = vpop.f32.mrf.mxu0
    %v1032 = vadd.f32 0.0, %v1031
    %v1033 = vpop.f32.mrf.mxu0
    %v1034 = vpop.f32.mrf.mxu0
    %v1035 = vpop.f32.mrf.mxu0
    %1036 = vdwg.mxu0
    %v1038 = vsel %vm847, %v938, 0
    %v1041 = vsel %vm947, %v472, 0
    %1043 = vmatprep.subr.bf16.mxu0 0
    %1044 = vmatpush1.bf16.msra.mxu0 0
    %1045 = vmatprep.subr.bf16.mxu0 0
    %1046 = vmatpush1.bf16.msra.mxu0 0
    %1047 = vmatprep.subr.bf16.mxu0 0
    %1048 = vmatpush1.bf16.msra.mxu0 0
    %1049 = vmatprep.subr.bf16.mxu0 0
    %1050 = vmatpush1.bf16.msra.mxu0 0
    %1051 = vmatprep.subr.bf16.mxu0 0
    %1052 = vmatpush1.bf16.msra.mxu0 0
    %1053 = vmatprep.subr.bf16.mxu0 0
    %1054 = vmatpush1.bf16.msra.mxu0 0
    %1055 = vmatprep.subr.bf16.mxu0 0
    %1056 = vmatpush1.bf16.msra.mxu0 0
    %1057 = vmatprep.subr.bf16.mxu0 0
    %1058 = vmatpush1.bf16.msra.mxu0 %v1041
    %1059 = vmatprep.subr.bf16.mxu0 0
    %1060 = vmatpush2.bf16.msra.mxu0 0
    %1061 = vmatprep.subr.bf16.mxu0 0
    %1062 = vmatpush2.bf16.msra.mxu0 0
    %1063 = vmatprep.subr.bf16.mxu0 0
    %1064 = vmatpush2.bf16.msra.mxu0 0
    %1065 = vmatprep.subr.bf16.mxu0 0
    %1066 = vmatpush2.bf16.msra.mxu0 0
    %1067 = vmatprep.subr.bf16.mxu0 0
    %1068 = vmatpush2.bf16.msra.mxu0 0
    %1069 = vmatprep.subr.bf16.mxu0 0
    %1070 = vmatpush2.bf16.msra.mxu0 0
    %1071 = vmatprep.subr.bf16.mxu0 0
    %1072 = vmatpush2.bf16.msra.mxu0 0
    %1073 = vmatprep.subr.bf16.mxu0 0
    %1074 = vmatpush2.bf16.msra.mxu0 0
    %1075 = vmatprep.mubr.bf16.mxu0 0
    %1076 = vmatmul.mubr.bf16.gmra.mxu0 %v1038
    %v1077 = vpop.f32.mrf.mxu0
    %v1078 = vadd.f32 0.0, %v1077
    %v1079 = vpop.f32.mrf.mxu0
    %v1080 = vpop.f32.mrf.mxu0
    %v1081 = vpop.f32.mrf.mxu0
    %1082 = vdwg.mxu0
    %v1084 = vsel %vm847, %v939, 0
    %v1087 = vsel %vm947, %v473, 0
    %1089 = vmatprep.subr.bf16.mxu0 0
    %1090 = vmatpush1.bf16.msra.mxu0 0
    %1091 = vmatprep.subr.bf16.mxu0 0
    %1092 = vmatpush1.bf16.msra.mxu0 0
    %1093 = vmatprep.subr.bf16.mxu0 0
    %1094 = vmatpush1.bf16.msra.mxu0 0
    %1095 = vmatprep.subr.bf16.mxu0 0
    %1096 = vmatpush1.bf16.msra.mxu0 0
    %1097 = vmatprep.subr.bf16.mxu0 0
    %1098 = vmatpush1.bf16.msra.mxu0 0
    %1099 = vmatprep.subr.bf16.mxu0 0
    %1100 = vmatpush1.bf16.msra.mxu0 0
    %1101 = vmatprep.subr.bf16.mxu0 0
    %1102 = vmatpush1.bf16.msra.mxu0 0
    %1103 = vmatprep.subr.bf16.mxu0 0
    %1104 = vmatpush1.bf16.msra.mxu0 %v1087
    %1105 = vmatprep.subr.bf16.mxu0 0
    %1106 = vmatpush2.bf16.msra.mxu0 0
    %1107 = vmatprep.subr.bf16.mxu0 0
    %1108 = vmatpush2.bf16.msra.mxu0 0
    %1109 = vmatprep.subr.bf16.mxu0 0
    %1110 = vmatpush2.bf16.msra.mxu0 0
    %1111 = vmatprep.subr.bf16.mxu0 0
    %1112 = vmatpush2.bf16.msra.mxu0 0
    %1113 = vmatprep.subr.bf16.mxu0 0
    %1114 = vmatpush2.bf16.msra.mxu0 0
    %1115 = vmatprep.subr.bf16.mxu0 0
    %1116 = vmatpush2.bf16.msra.mxu0 0
    %1117 = vmatprep.subr.bf16.mxu0 0
    %1118 = vmatpush2.bf16.msra.mxu0 0
    %1119 = vmatprep.subr.bf16.mxu0 0
    %1120 = vmatpush2.bf16.msra.mxu0 0
    %1121 = vmatprep.mubr.bf16.mxu0 0
    %1122 = vmatmul.mubr.bf16.gmra.mxu0 %v1084
    %v1123 = vpop.f32.mrf.mxu0
    %v1124 = vadd.f32 0.0, %v1123
    %v1125 = vpop.f32.mrf.mxu0
    %v1126 = vpop.f32.mrf.mxu0
    %v1127 = vpop.f32.mrf.mxu0
    %1128 = vdwg.mxu0
    %v1130 = vsel %vm847, %v940, 0
    %v1133 = vsel %vm947, %v474, 0
    %1135 = vmatprep.subr.bf16.mxu0 0
    %1136 = vmatpush1.bf16.msra.mxu0 0
    %1137 = vmatprep.subr.bf16.mxu0 0
    %1138 = vmatpush1.bf16.msra.mxu0 0
    %1139 = vmatprep.subr.bf16.mxu0 0
    %1140 = vmatpush1.bf16.msra.mxu0 0
    %1141 = vmatprep.subr.bf16.mxu0 0
    %1142 = vmatpush1.bf16.msra.mxu0 0
    %1143 = vmatprep.subr.bf16.mxu0 0
    %1144 = vmatpush1.bf16.msra.mxu0 0
    %1145 = vmatprep.subr.bf16.mxu0 0
    %1146 = vmatpush1.bf16.msra.mxu0 0
    %1147 = vmatprep.subr.bf16.mxu0 0
    %1148 = vmatpush1.bf16.msra.mxu0 0
    %1149 = vmatprep.subr.bf16.mxu0 0
    %1150 = vmatpush1.bf16.msra.mxu0 %v1133
    %1151 = vmatprep.subr.bf16.mxu0 0
    %1152 = vmatpush2.bf16.msra.mxu0 0
    %1153 = vmatprep.subr.bf16.mxu0 0
    %1154 = vmatpush2.bf16.msra.mxu0 0
    %1155 = vmatprep.subr.bf16.mxu0 0
    %1156 = vmatpush2.bf16.msra.mxu0 0
    %1157 = vmatprep.subr.bf16.mxu0 0
    %1158 = vmatpush2.bf16.msra.mxu0 0
    %1159 = vmatprep.subr.bf16.mxu0 0
    %1160 = vmatpush2.bf16.msra.mxu0 0
    %1161 = vmatprep.subr.bf16.mxu0 0
    %1162 = vmatpush2.bf16.msra.mxu0 0
    %1163 = vmatprep.subr.bf16.mxu0 0
    %1164 = vmatpush2.bf16.msra.mxu0 0
    %1165 = vmatprep.subr.bf16.mxu0 0
    %1166 = vmatpush2.bf16.msra.mxu0 0
    %1167 = vmatprep.mubr.bf16.mxu0 0
    %1168 = vmatmul.mubr.bf16.gmra.mxu0 %v1130
    %v1169 = vpop.f32.mrf.mxu0
    %v1170 = vadd.f32 0.0, %v1169
    %v1171 = vpop.f32.mrf.mxu0
    %v1172 = vpop.f32.mrf.mxu0
    %v1173 = vpop.f32.mrf.mxu0
    %1174 = vdwg.mxu0
    %v1176 = vsel %vm847, %v941, 0
    %v1179 = vsel %vm947, %v475, 0
    %1181 = vmatprep.subr.bf16.mxu0 0
    %1182 = vmatpush1.bf16.msra.mxu0 0
    %1183 = vmatprep.subr.bf16.mxu0 0
    %1184 = vmatpush1.bf16.msra.mxu0 0
    %1185 = vmatprep.subr.bf16.mxu0 0
    %1186 = vmatpush1.bf16.msra.mxu0 0
    %1187 = vmatprep.subr.bf16.mxu0 0
    %1188 = vmatpush1.bf16.msra.mxu0 0
    %1189 = vmatprep.subr.bf16.mxu0 0
    %1190 = vmatpush1.bf16.msra.mxu0 0
    %1191 = vmatprep.subr.bf16.mxu0 0
    %1192 = vmatpush1.bf16.msra.mxu0 0
    %1193 = vmatprep.subr.bf16.mxu0 0
    %1194 = vmatpush1.bf16.msra.mxu0 0
    %1195 = vmatprep.subr.bf16.mxu0 0
    %1196 = vmatpush1.bf16.msra.mxu0 %v1179
    %1197 = vmatprep.subr.bf16.mxu0 0
    %1198 = vmatpush2.bf16.msra.mxu0 0
    %1199 = vmatprep.subr.bf16.mxu0 0
    %1200 = vmatpush2.bf16.msra.mxu0 0
    %1201 = vmatprep.subr.bf16.mxu0 0
    %1202 = vmatpush2.bf16.msra.mxu0 0
    %1203 = vmatprep.subr.bf16.mxu0 0
    %1204 = vmatpush2.bf16.msra.mxu0 0
    %1205 = vmatprep.subr.bf16.mxu0 0
    %1206 = vmatpush2.bf16.msra.mxu0 0
    %1207 = vmatprep.subr.bf16.mxu0 0
    %1208 = vmatpush2.bf16.msra.mxu0 0
    %1209 = vmatprep.subr.bf16.mxu0 0
    %1210 = vmatpush2.bf16.msra.mxu0 0
    %1211 = vmatprep.subr.bf16.mxu0 0
    %1212 = vmatpush2.bf16.msra.mxu0 0
    %1213 = vmatprep.mubr.bf16.mxu0 0
    %1214 = vmatmul.mubr.bf16.gmra.mxu0 %v1176
    %v1215 = vpop.f32.mrf.mxu0
    %v1216 = vadd.f32 0.0, %v1215
    %v1217 = vpop.f32.mrf.mxu0
    %v1218 = vpop.f32.mrf.mxu0
    %v1219 = vpop.f32.mrf.mxu0
    %1220 = vdwg.mxu0
    %v1222 = vsel %vm847, %v942, 0
    %v1225 = vsel %vm947, %v476, 0
    %1227 = vmatprep.subr.bf16.mxu0 0
    %1228 = vmatpush1.bf16.msra.mxu0 0
    %1229 = vmatprep.subr.bf16.mxu0 0
    %1230 = vmatpush1.bf16.msra.mxu0 0
    %1231 = vmatprep.subr.bf16.mxu0 0
    %1232 = vmatpush1.bf16.msra.mxu0 0
    %1233 = vmatprep.subr.bf16.mxu0 0
    %1234 = vmatpush1.bf16.msra.mxu0 0
    %1235 = vmatprep.subr.bf16.mxu0 0
    %1236 = vmatpush1.bf16.msra.mxu0 0
    %1237 = vmatprep.subr.bf16.mxu0 0
    %1238 = vmatpush1.bf16.msra.mxu0 0
    %1239 = vmatprep.subr.bf16.mxu0 0
    %1240 = vmatpush1.bf16.msra.mxu0 0
    %1241 = vmatprep.subr.bf16.mxu0 0
    %1242 = vmatpush1.bf16.msra.mxu0 %v1225
    %1243 = vmatprep.subr.bf16.mxu0 0
    %1244 = vmatpush2.bf16.msra.mxu0 0
    %1245 = vmatprep.subr.bf16.mxu0 0
    %1246 = vmatpush2.bf16.msra.mxu0 0
    %1247 = vmatprep.subr.bf16.mxu0 0
    %1248 = vmatpush2.bf16.msra.mxu0 0
    %1249 = vmatprep.subr.bf16.mxu0 0
    %1250 = vmatpush2.bf16.msra.mxu0 0
    %1251 = vmatprep.subr.bf16.mxu0 0
    %1252 = vmatpush2.bf16.msra.mxu0 0
    %1253 = vmatprep.subr.bf16.mxu0 0
    %1254 = vmatpush2.bf16.msra.mxu0 0
    %1255 = vmatprep.subr.bf16.mxu0 0
    %1256 = vmatpush2.bf16.msra.mxu0 0
    %1257 = vmatprep.subr.bf16.mxu0 0
    %1258 = vmatpush2.bf16.msra.mxu0 0
    %1259 = vmatprep.mubr.bf16.mxu0 0
    %1260 = vmatmul.mubr.bf16.gmra.mxu0 %v1222
    %v1261 = vpop.f32.mrf.mxu0
    %v1262 = vadd.f32 0.0, %v1261
    %v1263 = vpop.f32.mrf.mxu0
    %v1264 = vpop.f32.mrf.mxu0
    %v1265 = vpop.f32.mrf.mxu0
    %1266 = vdwg.mxu0
    %v1268 = vsel %vm847, %v943, 0
    %v1271 = vsel %vm947, %v477, 0
    %1273 = vmatprep.subr.bf16.mxu0 0
    %1274 = vmatpush1.bf16.msra.mxu0 0
    %1275 = vmatprep.subr.bf16.mxu0 0
    %1276 = vmatpush1.bf16.msra.mxu0 0
    %1277 = vmatprep.subr.bf16.mxu0 0
    %1278 = vmatpush1.bf16.msra.mxu0 0
    %1279 = vmatprep.subr.bf16.mxu0 0
    %1280 = vmatpush1.bf16.msra.mxu0 0
    %1281 = vmatprep.subr.bf16.mxu0 0
    %1282 = vmatpush1.bf16.msra.mxu0 0
    %1283 = vmatprep.subr.bf16.mxu0 0
    %1284 = vmatpush1.bf16.msra.mxu0 0
    %1285 = vmatprep.subr.bf16.mxu0 0
    %1286 = vmatpush1.bf16.msra.mxu0 0
    %1287 = vmatprep.subr.bf16.mxu0 0
    %1288 = vmatpush1.bf16.msra.mxu0 %v1271
    %1289 = vmatprep.subr.bf16.mxu0 0
    %1290 = vmatpush2.bf16.msra.mxu0 0
    %1291 = vmatprep.subr.bf16.mxu0 0
    %1292 = vmatpush2.bf16.msra.mxu0 0
    %1293 = vmatprep.subr.bf16.mxu0 0
    %1294 = vmatpush2.bf16.msra.mxu0 0
    %1295 = vmatprep.subr.bf16.mxu0 0
    %1296 = vmatpush2.bf16.msra.mxu0 0
    %1297 = vmatprep.subr.bf16.mxu0 0
    %1298 = vmatpush2.bf16.msra.mxu0 0
    %1299 = vmatprep.subr.bf16.mxu0 0
    %1300 = vmatpush2.bf16.msra.mxu0 0
    %1301 = vmatprep.subr.bf16.mxu0 0
    %1302 = vmatpush2.bf16.msra.mxu0 0
    %1303 = vmatprep.subr.bf16.mxu0 0
    %1304 = vmatpush2.bf16.msra.mxu0 0
    %1305 = vmatprep.mubr.bf16.mxu0 0
    %1306 = vmatmul.mubr.bf16.gmra.mxu0 %v1268
    %v1307 = vpop.f32.mrf.mxu0
    %v1308 = vadd.f32 0.0, %v1307
    %v1309 = vpop.f32.mrf.mxu0
    %v1310 = vpop.f32.mrf.mxu0
    %v1311 = vpop.f32.mrf.mxu0
    %1312 = vdwg.mxu0
    %1315 = vrot.lane.b32.xlu0 %v1078, 16
    %v1316 = vpop.permute.xlu0 %1315
    %1317 = vrot.lane.b32.xlu0 %v1124, 16
    %v1318 = vpop.permute.xlu0 %1317
    %1323 = vrot.lane.b32.xlu0 %v1170, 32
    %v1324 = vpop.permute.xlu0 %1323
    %1325 = vrot.lane.b32.xlu0 %v1216, 32
    %v1326 = vpop.permute.xlu0 %1325
    %1331 = vrot.lane.b32.xlu0 %v1262, 48
    %v1332 = vpop.permute.xlu0 %1331
    %1333 = vrot.lane.b32.xlu0 %v1308, 48
    %v1334 = vpop.permute.xlu0 %1333
    %v1337 = vsel %vm478, %v986, %v1316
    %v1338 = vsel %vm478, %v1032, %v1318
    %vm1339 = vcmask 261120
    %v1340 = vsel %vm1339, %v1337, %v1324
    %v1341 = vsel %vm1339, %v1338, %v1326
    %vm1342 = vcmask 392192
    %v1343 = vsel %vm1342, %v1340, %v1332
    %v1344 = vsel %vm1342, %v1341, %v1334
    %v1345 = vpack.c.bf16 %v1344, %v1343
    %v1346 = vld [vmem:[#allocation13] sm:$0xf]
    %v1347 = vld [vmem:[#allocation13 + $0x4] sm:$0xf]
    %v1348 = vld [vmem:[#allocation13 + $0x8] sm:$0xf]
    %v1349 = vld [vmem:[#allocation13 + $0xc] sm:$0xf]
    %v1350 = vld [vmem:[#allocation13 + $0x10] sm:$0xf]
    %v1351 = vld [vmem:[#allocation13 + $0x14] sm:$0xf]
    %v1352 = vld [vmem:[#allocation13 + $0x18] sm:$0xf]
    %v1353 = vld [vmem:[#allocation13 + $0x1c] sm:$0xf]
    %v1354 = vld [vmem:[%s10] sm:$0x1]
    %v1356 = vlaneseq
    %v1357 = vshrl.u32 %v1356, 7
    %v1358 = vsub.s32 0, %v1357
    %v1359 = vrot.slane %v1354, %v1358
    %v1369 = vunpack.c.l.b16 %v1346
    %v1370 = vunpack.c.l.b16 %v1347
    %v1371 = vunpack.c.l.b16 %v1348
    %v1372 = vunpack.c.l.b16 %v1349
    %v1373 = vunpack.c.l.b16 %v1350
    %v1374 = vunpack.c.l.b16 %v1351
    %v1375 = vunpack.c.l.b16 %v1352
    %v1376 = vunpack.c.l.b16 %v1353
    %v1377 = vpack.c.b16 %v1370, %v1369
    %v1378 = vpack.c.b16 %v1372, %v1371
    %v1379 = vpack.c.b16 %v1374, %v1373
    %v1380 = vpack.c.b16 %v1376, %v1375
    %v1386 = vsel %vm177, %v1345, 0
    %1388 = vmatprep.subr.bf16.mxu0 0
    %1389 = vmatpush1.bf16.msra.mxu0 0
    %1390 = vmatprep.subr.bf16.mxu0 0
    %1391 = vmatpush1.bf16.msra.mxu0 0
    %1392 = vmatprep.subr.bf16.mxu0 0
    %1393 = vmatpush1.bf16.msra.mxu0 0
    %1394 = vmatprep.subr.bf16.mxu0 0
    %1395 = vmatpush1.bf16.msra.mxu0 0
    %1396 = vmatprep.subr.bf16.mxu0 0
    %1397 = vmatpush1.bf16.msra.mxu0 %v1380
    %1398 = vmatprep.subr.bf16.mxu0 0
    %1399 = vmatpush1.bf16.msra.mxu0 %v1379
    %1400 = vmatprep.subr.bf16.mxu0 0
    %1401 = vmatpush1.bf16.msra.mxu0 %v1378
    %1402 = vmatprep.subr.bf16.mxu0 0
    %1403 = vmatpush1.bf16.msra.mxu0 %v1377
    %1404 = vmatprep.subr.bf16.mxu0 0
    %1405 = vmatpush2.bf16.msra.mxu0 0
    %1406 = vmatprep.subr.bf16.mxu0 0
    %1407 = vmatpush2.bf16.msra.mxu0 0
    %1408 = vmatprep.subr.bf16.mxu0 0
    %1409 = vmatpush2.bf16.msra.mxu0 0
    %1410 = vmatprep.subr.bf16.mxu0 0
    %1411 = vmatpush2.bf16.msra.mxu0 0
    %1412 = vmatprep.subr.bf16.mxu0 0
    %1413 = vmatpush2.bf16.msra.mxu0 0
    %1414 = vmatprep.subr.bf16.mxu0 0
    %1415 = vmatpush2.bf16.msra.mxu0 0
    %1416 = vmatprep.subr.bf16.mxu0 0
    %1417 = vmatpush2.bf16.msra.mxu0 0
    %1418 = vmatprep.subr.bf16.mxu0 0
    %1419 = vmatpush2.bf16.msra.mxu0 0
    %1420 = vmatprep.mubr.bf16.mxu0 0
    %1421 = vmatmul.mubr.bf16.gmra.mxu0 %v1386
    %v1422 = vpop.f32.mrf.mxu0
    %v1423 = vadd.f32 %v1359, %v1422
    %v1424 = vpop.f32.mrf.mxu0
    %v1425 = vpop.f32.mrf.mxu0
    %v1426 = vadd.f32 %v1359, %v1425
    %v1427 = vpop.f32.mrf.mxu0
    %1428 = vdwg.mxu0
    %1429 = vst.msk [vmem:[#allocation14] sm:$0xff] %vm177, %v1423
    %1430 = vst.msk [vmem:[#allocation14 + $0x8] sm:$0xff] %vm177, %v1426
    // Predicated region
    $region74: #{tpu_custom_call.1} parent=1 // pred_check
      _
    $region75: #{tpu_custom_call.1} parent=1 // pred_check_branch
      %1432 = sbr.rel (0) target = $region77
    $region76: #{tpu_custom_call.1} parent=1 // pred_region
      %s1434 = ssub.s32 256, 256
      %1435 = vsyncadd [#allocation4], %s1434
      %s1436 = sshll.u32 [#allocation14], 4
      %s1437 = int_to_ptr.vmem [resolvable:$true] %s1436
      %1442 = dma.vmem_to_hbm [thread:$0]  %s1437, 256, %s11, [#allocation4], 128, 128, 8
    $region77: #{tpu_custom_call.1} parent=1 // pred_fallthru
      _
    // Predicated region
    $region78: #{tpu_custom_call.1} parent=1 // pred_check
      _
    $region79: #{tpu_custom_call.1} parent=1 // pred_check_branch
      %1444 = sbr.rel (0) target = $region81
    $region80: #{tpu_custom_call.1} parent=1 // pred_region
      %1445 = dma.done [#allocation4], 256
    $region81: #{tpu_custom_call.1} parent=1 // pred_fallthru
      _
    %1446 = vsyncpa [#allocation3], 1
    %1447 = vsyncpa [#allocation6], 1
    %1448 = vsyncpa [#allocation9], 1
    %1449 = vsyncpa [#allocation12], 1
    %1450 = vsyncpa [#allocation4], 1

</llo_original>
